<compile_context>
chip_gen: v5e
topology: v5e:2x2
jax: 0.10.0
libtpu: 0.0.40
codegen_flags: <defaults>
</compile_context>

<pallas_src>
import functools

import numpy as np
import jax
import jax.numpy as jnp
from jax import lax
from jax.experimental import pallas as pl
from jax.experimental.pallas import tpu as pltpu

N_HIDDEN = 128          # = dimension (feature size of the decoder)
N_LANDMARKS = 2         # = `channels` arg of MyDecoder (small & non-degenerate)
N_COORDS = 2
EPS = 1e-5


def _round_up(x, m):
    return (x + m - 1) // m * m


# --------------------------------------------------------------------------- #
# kernel 1: masked BatchNorm1d statistics (per-tile partial sums)
# --------------------------------------------------------------------------- #
def _bn1_stats_kernel(data_ref, mask_ref, stat_ref, *, ts, s_valid):
    j = pl.program_id(1)
    x = data_ref[0]                                             # (TS, 128)
    row = lax.broadcasted_iota(jnp.int32, (ts, 1), 0) + j * ts
    valid = (mask_ref[0] > 0.0) & (row < s_valid)               # kills overhang garbage
    xm = jnp.where(valid, x, 0.0)                               # select (NaN-safe)
    s1 = jnp.sum(xm, axis=0, keepdims=True)                     # (1,128) sum(x)
    s2 = jnp.sum(xm * xm, axis=0, keepdims=True)                # (1,128) sum(x^2)
    cnt = jnp.sum(jnp.where(valid, 1.0, 0.0), axis=0, keepdims=True)   # (1,1)
    stat_ref[0, 0] = jnp.concatenate(
        [s1, s2, jnp.broadcast_to(cnt, (1, 128))], axis=0)      # (3,128)


# --------------------------------------------------------------------------- #
# kernel 2: BN1 apply + fused stem/ConvTranspose matmul (lane-dense tail)
#           + BN2 partial statistics
# --------------------------------------------------------------------------- #
def _conv_kernel(data_ref, mask_ref, halo_ref, scale1_ref, shift1_ref, wcatT_ref,
                 conv_ref, stat_ref, *, ts, s_valid):
    j = pl.program_id(1)

    # masked BN1 (folded affine); rows >= S and mask==0 rows are zeroed exactly.
    row = lax.broadcasted_iota(jnp.int32, (ts, 1), 0) + j * ts
    valid = (mask_ref[0] > 0.0) & (row < s_valid)               # (TS,1)
    x = jnp.where(valid, data_ref[0] * scale1_ref[...] + shift1_ref[...], 0.0)

    # one MXU matmul for stem_linear1 + all three ConvTranspose taps, producing
    # the lane-dense transposed result: (16,128) @ (TS,128)^T -> (16, TS)
    t_t = lax.dot_general(wcatT_ref[...], x, (((1,), (1,)), ((), ())),
                          preferred_element_type=jnp.float32)

    # tile-boundary taps (computed in the wrapper): rows j*TS-1 / (j+1)*TS
    hb = halo_ref[0, 0]                                         # (8,1)
    c_prev = hb[0:4, :]                                         # (4,1) = t[j*TS-1, 8:12]
    c_next = hb[4:8, :]                                         # (4,1) = t[(j+1)*TS, 0:4]

    # conv[s] = t[s+1, 0:4] + t[s, 4:8] + t[s-1, 8:12]  (lane rolls on the XLU,
    # boundary columns injected with a lane-iota select)
    col = lax.broadcasted_iota(jnp.int32, (4, ts), 1)
    up = jnp.where(col == ts - 1, c_next,
                   pltpu.roll(t_t[0:4, :], ts - 1, axis=1))     # -> t[s+1, 0:4]
    dn = jnp.where(col == 0, c_prev,
                   pltpu.roll(t_t[8:12, :], 1, axis=1))         # -> t[s-1, 8:12]
    conv_t = up + t_t[4:8, :] + dn                              # (4, TS) lane-dense
    conv_ref[0] = conv_t

    # BN2 partial statistics over columns that exist in the original sequence
    cv = jnp.where(col + j * ts < s_valid, conv_t, 0.0)
    s = jnp.sum(cv, axis=1, keepdims=True)                      # (4,1)
    q = jnp.sum(cv * cv, axis=1, keepdims=True)                 # (4,1)
    stat_ref[0, 0] = jnp.concatenate([s, q], axis=0)            # (8,1)


# --------------------------------------------------------------------------- #
# kernel 3: BatchNormAct2d (folded) + SiLU + final 4x4 linear (one block/batch)
# --------------------------------------------------------------------------- #
def _head_kernel(conv_ref, scale2_ref, shift2_ref, wf_ref, out_ref):
    c = conv_ref[0]                                             # (4, S) lane-dense
    zb = c * scale2_ref[...] + shift2_ref[...]                  # folded BN2 affine
    z = zb * jax.nn.sigmoid(zb)                                 # SiLU
    # final 4x4 linear on lane-dense rows: out[i] = sum_k wf[k, i] * z[k]
    for i in range(4):
        acc = wf_ref[0, i] * z[0:1, :]
        for k in range(1, 4):
            acc = acc + wf_ref[k, i] * z[k:k + 1, :]
        out_ref[0, i:i + 1, :] = acc


# --------------------------------------------------------------------------- #
# wrapper
# --------------------------------------------------------------------------- #
def my_decoder_forward(data, mask, params, *, ts_target=1024):
    bs, S, nfeat = data.shape
    assert nfeat == N_HIDDEN

    mask_f = mask.astype(jnp.float32)
    mask3 = mask_f[..., None]                                   # (bs, S, 1)

    # sequence tiling: TS is a multiple of 128 so every block is layout-legal;
    # the last tile may overhang S (handled inside the kernels, no jnp.pad copy).
    TS = _round_up(min(S, ts_target), 128)
    NT = -(-S // TS)

    cp = pltpu.CompilerParams(
        # both axes independent -> megacore-shardable on v7x (bs first, NT second)
        dimension_semantics=("parallel", "parallel"),
        vmem_limit_bytes=32 * 1024 * 1024,
    )

    # ---- pass 1: masked BN1 statistics (per-tile partials, combined below) ----
    part1 = pl.pallas_call(
        functools.partial(_bn1_stats_kernel, ts=TS, s_valid=S),
        grid=(bs, NT),
        in_specs=[
            pl.BlockSpec((1, TS, N_HIDDEN), lambda b, j: (b, j, 0)),
            pl.BlockSpec((1, TS, 1), lambda b, j: (b, j, 0)),
        ],
        out_specs=pl.BlockSpec((1, 1, 3, 128), lambda b, j: (b, j, 0, 0)),
        out_shape=jax.ShapeDtypeStruct((bs, NT, 3, 128), jnp.float32),
        compiler_params=cp,
    )(data, mask3)

    red1 = jnp.sum(part1, axis=(0, 1))                          # (3,128)
    cnt = jnp.maximum(red1[2, 0], 1.0)                          # guard all-padded batch
    inv_cnt = 1.0 / cnt
    mean1 = red1[0] * inv_cnt
    var1 = red1[1] * inv_cnt - mean1 * mean1                    # single-pass variance
    inv1 = lax.rsqrt(var1 + EPS)
    g1 = params["gamma1"].reshape(-1)
    b1 = params["beta1"].reshape(-1)
    scale1 = (g1 * inv1)[None, :]                               # (1,128)
    shift1 = (b1 - mean1 * g1 * inv1)[None, :]                  # (1,128)

    # ---- fold stem_linear1 into the three ConvTranspose taps ----
    ws = params["w_stem"]                                       # (128,32)
    wc = params["wc"]                                           # (3,32,4)
    wcat = jnp.concatenate([ws @ wc[0], ws @ wc[1], ws @ wc[2]], axis=1)   # (128,12)
    wcatT = jnp.pad(wcat.T, ((0, 4), (0, 0)))                   # (16,128), rows 12..15 zero

    # ---- tile-boundary (halo) conv taps, computed once on tiny boundary rows ----
    if NT > 1:
        pr = data[:, TS - 1:(NT - 1) * TS:TS, :]                # rows j*TS-1, j=1..NT-1
        nr = data[:, TS:(NT - 1) * TS + 1:TS, :]                # rows (j+1)*TS, j=0..NT-2
        pm = mask_f[:, TS - 1:(NT - 1) * TS:TS, None]
        nm = mask_f[:, TS:(NT - 1) * TS + 1:TS, None]
        xb_p = (pr * scale1 + shift1) * pm
        xb_n = (nr * scale1 + shift1) * nm
        c_prev = xb_p @ wcat[:, 8:12]                           # (bs, NT-1, 4)
        c_next = xb_n @ wcat[:, 0:4]                            # (bs, NT-1, 4)
        z4 = jnp.zeros((bs, 1, 4), jnp.float32)
        halo = jnp.concatenate(
            [jnp.concatenate([z4, c_prev], axis=1),             # conv zero-pad at s=-1
             jnp.concatenate([c_next, z4], axis=1)],            # conv zero-pad at s>=S
            axis=2)[..., None]                                  # (bs, NT, 8, 1)
    else:
        halo = jnp.zeros((bs, 1, 8, 1), jnp.float32)

    # ---- pass 2: BN1 apply + fused matmul + conv (lane-dense) + BN2 partials ----
    conv_t, part2 = pl.pallas_call(
        functools.partial(_conv_kernel, ts=TS, s_valid=S),
        grid=(bs, NT),
        in_specs=[
            pl.BlockSpec((1, TS, N_HIDDEN), lambda b, j: (b, j, 0)),
            pl.BlockSpec((1, TS, 1), lambda b, j: (b, j, 0)),
            pl.BlockSpec((1, 1, 8, 1), lambda b, j: (b, j, 0, 0)),
            pl.BlockSpec((1, N_HIDDEN), lambda b, j: (0, 0)),
            pl.BlockSpec((1, N_HIDDEN), lambda b, j: (0, 0)),
            pl.BlockSpec((16, N_HIDDEN), lambda b, j: (0, 0)),
        ],
        out_specs=(
            pl.BlockSpec((1, 4, TS), lambda b, j: (b, 0, j)),
            pl.BlockSpec((1, 1, 8, 1), lambda b, j: (b, j, 0, 0)),
        ),
        out_shape=(
            jax.ShapeDtypeStruct((bs, 4, S), jnp.float32),      # lane-dense conv
            jax.ShapeDtypeStruct((bs, NT, 8, 1), jnp.float32),
        ),
        compiler_params=cp,
    )(data, mask3, halo, scale1, shift1, wcatT)

    # ---- BN2 statistics (channel = column % 2), folded scale/shift ----
    r2 = jnp.sum(part2, axis=(0, 1))[:, 0]                      # (8,) = [s0..s3, q0..q3]
    n2_inv = 1.0 / jnp.float32(bs * S * 2)
    mu_c = jnp.stack([r2[0] + r2[2], r2[1] + r2[3]]) * n2_inv
    ex2_c = jnp.stack([r2[4] + r2[6], r2[5] + r2[7]]) * n2_inv
    inv_c = lax.rsqrt(ex2_c - mu_c * mu_c + EPS)
    sc_c = params["gamma2"] * inv_c
    scale2 = jnp.tile(sc_c, 2).reshape(4, 1)                    # (4,1)
    shift2 = jnp.tile(params["beta2"] - mu_c * sc_c, 2).reshape(4, 1)

    # ---- pass 3: BN2 + SiLU + final linear, one lane-dense block per batch ----
    out_t = pl.pallas_call(
        _head_kernel,
        grid=(bs,),
        in_specs=[
            pl.BlockSpec((1, 4, S), lambda b: (b, 0, 0)),
            pl.BlockSpec((4, 1), lambda b: (0, 0)),
            pl.BlockSpec((4, 1), lambda b: (0, 0)),
            pl.BlockSpec(memory_space=pltpu.MemorySpace.SMEM),
        ],
        out_specs=pl.BlockSpec((1, 4, S), lambda b: (b, 0, 0)),
        out_shape=jax.ShapeDtypeStruct((bs, 4, S), jnp.float32),
        compiler_params=pltpu.CompilerParams(
            dimension_semantics=("parallel",),
            vmem_limit_bytes=32 * 1024 * 1024,
        ),
    )(conv_t, scale2, shift2, params["wf"])

    # tiny XLA transpose of the lane-dense result back to (bs, S, landmarks, coords)
    return jnp.transpose(out_t, (0, 2, 1)).reshape(bs, S, N_LANDMARKS, N_COORDS)


# --------------------------------------------------------------------------- #
# pure-JAX reference (mirrors the PyTorch forward) and parameters
# --------------------------------------------------------------------------- #
def reference_forward(data, mask, p):
    bs, slen, F = data.shape
    m3 = mask[:, :, None]
    cnt = jnp.sum(mask)
    xm = data * m3
    mean1 = jnp.sum(xm, axis=(0, 1)) / cnt
    var1 = jnp.sum(xm * xm, axis=(0, 1)) / cnt - mean1 ** 2
    xhat = (data - mean1) / jnp.sqrt(var1 + EPS)
    x = (xhat * p["gamma1"][0] + p["beta1"][0]) * m3
    h = x @ p["w_stem"]
    zpad = jnp.zeros((bs, 1, 32), dtype=h.dtype)
    h_up = jnp.concatenate([h[:, 1:, :], zpad], 1)
    h_dn = jnp.concatenate([zpad, h[:, :-1, :]], 1)
    wc = p["wc"]
    conv = h_up @ wc[0] + h @ wc[1] + h_dn @ wc[2]              # (bs, slen, 4)
    conv_r = conv.reshape(bs, slen, 2, 2)                       # (b, s, w, c)
    mu = jnp.mean(conv_r, axis=(0, 1, 2))
    var = jnp.mean(conv_r ** 2, axis=(0, 1, 2)) - mu ** 2
    zb = (conv_r - mu) / jnp.sqrt(var + EPS) * p["gamma2"] + p["beta2"]
    z = (zb * jax.nn.sigmoid(zb)).reshape(bs, slen, 4)
    y = z @ p["wf"]
    return y.reshape(bs, slen, 2, 2)


def init_params(key):
    ks = jax.random.split(key, 7)
    # stem_linear1: torch weight (32, 128); kernel uses its transpose (128, 32)
    w_stem = 0.05 * jax.random.normal(ks[0], (N_HIDDEN, (N_LANDMARKS // 2) * 32), jnp.float32)
    # BatchNorm1d(128) affine params
    gamma1 = (1.0 + 0.1 * jax.random.normal(ks[1], (1, N_HIDDEN), jnp.float32))
    beta1 = 0.05 * jax.random.normal(ks[2], (1, N_HIDDEN), jnp.float32)
    # ConvTranspose2d weight, torch layout (in=32, out=2, kh=3, kw=3)
    w_conv = 0.1 * jax.random.normal(ks[3], (32, N_COORDS, 3, 3), jnp.float32)
    # pack: wc[kh, ci, 2*w + c] = w_conv[ci, c, kh, w + 1]   (only kw in {1,2} matter)
    wc = jnp.transpose(w_conv[:, :, :, 1:3], (2, 0, 3, 1)).reshape(3, 32, 4)
    # BatchNormAct2d(2) affine params
    gamma2 = jnp.asarray([1.1, 0.9], jnp.float32)
    beta2 = jnp.asarray([0.02, -0.03], jnp.float32)
    # final_linear: torch weight (4, 4); kernel uses its transpose
    wf_torch = 0.3 * jax.random.normal(ks[4], (N_LANDMARKS * N_COORDS,) * 2, jnp.float32)
    wf = wf_torch.T
    return {"w_stem": w_stem, "gamma1": gamma1, "beta1": beta1,
            "wc": wc, "gamma2": gamma2, "beta2": beta2, "wf": wf}


if __name__ == "__main__":
    key = jax.random.PRNGKey(0)
    kd, kp, kd2 = jax.random.split(key, 3)
    params = init_params(kp)

    fwd_default = jax.jit(lambda d, m: my_decoder_forward(d, m, params))
    fwd_small_tile = jax.jit(lambda d, m: my_decoder_forward(d, m, params, ts_target=128))

    # test 1: single sequence tile per batch element (TS overhangs S -> masked rows)
    bs, slen = 2, 16
    data = jax.random.normal(kd, (bs, slen, N_HIDDEN), jnp.float32)
    lengths = np.array([16, 12])
    mask = jnp.asarray((np.arange(slen)[None, :] < lengths[:, None]).astype(np.float32))
    out = jax.block_until_ready(fwd_default(data, mask))
    assert out.shape == (bs, slen, N_LANDMARKS, N_COORDS), out.shape
    ref = jax.block_until_ready(reference_forward(data, mask, params))
    np.testing.assert_allclose(np.asarray(out), np.asarray(ref), rtol=2e-3, atol=2e-3)

    # test 2: multiple sequence tiles + ragged last tile (exercises halo / overhang)
    bs2, slen2 = 2, 300
    data2 = jax.random.normal(kd2, (bs2, slen2, N_HIDDEN), jnp.float32)
    lengths2 = np.array([300, 180])
    mask2 = jnp.asarray((np.arange(slen2)[None, :] < lengths2[:, None]).astype(np.float32))
    out2 = jax.block_until_ready(fwd_small_tile(data2, mask2))
    ref2 = jax.block_until_ready(reference_forward(data2, mask2, params))
    np.testing.assert_allclose(np.asarray(out2), np.asarray(ref2), rtol=2e-3, atol=2e-3)

    print("KERNEL_OK")
</pallas_src>

<mosaic_0001>
module attributes {stable_mosaic.version = 11 : i64} {
  func.func @_bn1_stats_kernel(%arg0: i32, %arg1: i32, %arg2: memref<1x128x128xf32, #tpu.memory_space<vmem>>, %arg3: memref<1x128x1xf32, #tpu.memory_space<vmem>>, %arg4: memref<1x1x3x128xf32, #tpu.memory_space<vmem>>) attributes {dimension_semantics = [#tpu.dimension_semantics<parallel>, #tpu.dimension_semantics<parallel>], iteration_bounds = array<i64: 2, 1>, scalar_prefetch = 0 : i64, scratch_operands = 0 : i64, tpu.core_type = #tpu.core_type<tc>, window_params = [{transform_indices = @transform_0, window_bounds = array<i64: 1, 128, 128>}, {transform_indices = @transform_1, window_bounds = array<i64: 1, 128, 1>}, {transform_indices = @transform_2, window_bounds = array<i64: 1, 1, 3, 128>}]} {
    %c0 = arith.constant 0 : index
    %c0_0 = arith.constant 0 : index
    %c0_1 = arith.constant 0 : index
    %0 = vector.load %arg2[%c0, %c0_0, %c0_1] : memref<1x128x128xf32, #tpu.memory_space<vmem>>, vector<1x128x128xf32>
    %1 = vector.shape_cast %0 : vector<1x128x128xf32> to vector<128x128xf32>
    %2 = tpu.iota {dimensions = array<i32: 0>} : vector<128x1xi32>
    %c128_i32 = arith.constant 128 : i32
    %3 = arith.muli %arg1, %c128_i32 : i32
    %4 = vector.broadcast %3 : i32 to vector<128x1xi32>
    %5 = arith.addi %2, %4 : vector<128x1xi32>
    %c0_2 = arith.constant 0 : index
    %c0_3 = arith.constant 0 : index
    %c0_4 = arith.constant 0 : index
    %6 = vector.load %arg3[%c0_2, %c0_3, %c0_4] : memref<1x128x1xf32, #tpu.memory_space<vmem>>, vector<1x128x1xf32>
    %7 = vector.shape_cast %6 : vector<1x128x1xf32> to vector<128x1xf32>
    %cst = arith.constant 0.000000e+00 : f32
    %8 = vector.broadcast %cst : f32 to vector<128x1xf32>
    %9 = arith.cmpf ogt, %7, %8 : vector<128x1xf32>
    %c16_i32 = arith.constant 16 : i32
    %10 = vector.broadcast %c16_i32 : i32 to vector<128x1xi32>
    %11 = arith.cmpi slt, %5, %10 : vector<128x1xi32>
    %12 = arith.andi %9, %11 : vector<128x1xi1>
    %cst_5 = arith.constant 0.000000e+00 : f32
    %13 = vector.shape_cast %12 : vector<128x1xi1> to vector<128x1xi1>
    %14 = vector.broadcast %13 : vector<128x1xi1> to vector<128x128xi1>
    %15 = vector.broadcast %cst_5 : f32 to vector<128x128xf32>
    %16 = arith.select %14, %1, %15 : vector<128x128xi1>, vector<128x128xf32>
    %cst_6 = arith.constant dense<0.000000e+00> : vector<128xf32>
    %17 = vector.multi_reduction <add>, %16, %cst_6 [0] : vector<128x128xf32> to vector<128xf32>
    %18 = vector.shape_cast %17 : vector<128xf32> to vector<1x128xf32>
    %19 = arith.mulf %16, %16 : vector<128x128xf32>
    %cst_7 = arith.constant dense<0.000000e+00> : vector<128xf32>
    %20 = vector.multi_reduction <add>, %19, %cst_7 [0] : vector<128x128xf32> to vector<128xf32>
    %21 = vector.shape_cast %20 : vector<128xf32> to vector<1x128xf32>
    %cst_8 = arith.constant 1.000000e+00 : f32
    %cst_9 = arith.constant 0.000000e+00 : f32
    %22 = vector.broadcast %cst_8 : f32 to vector<128x1xf32>
    %23 = vector.broadcast %cst_9 : f32 to vector<128x1xf32>
    %24 = arith.select %12, %22, %23 : vector<128x1xi1>, vector<128x1xf32>
    %cst_10 = arith.constant dense<0.000000e+00> : vector<1xf32>
    %25 = vector.multi_reduction <add>, %24, %cst_10 [0] : vector<128x1xf32> to vector<1xf32>
    %26 = vector.shape_cast %25 : vector<1xf32> to vector<1x1xf32>
    %27 = vector.shape_cast %26 : vector<1x1xf32> to vector<1x1xf32>
    %28 = vector.broadcast %27 : vector<1x1xf32> to vector<1x128xf32>
    %29 = tpu.concatenate %18, %21, %28 in 0 : vector<1x128xf32>, vector<1x128xf32>, vector<1x128xf32> -> vector<3x128xf32>
    %c0_11 = arith.constant 0 : index
    %c0_12 = arith.constant 0 : index
    %c0_13 = arith.constant 0 : index
    %c0_14 = arith.constant 0 : index
    %30 = vector.load %arg4[%c0_11, %c0_12, %c0_13, %c0_14] : memref<1x1x3x128xf32, #tpu.memory_space<vmem>>, vector<1x1x3x128xf32>
    %31 = vector.shape_cast %30 : vector<1x1x3x128xf32> to vector<3x128xf32>
    %32 = vector.shape_cast %29 : vector<3x128xf32> to vector<1x1x3x128xf32>
    tpu.vector_store %arg4[%c0_11, %c0_12, %c0_13, %c0_14], %32 {strides = array<i32>} : memref<1x1x3x128xf32, #tpu.memory_space<vmem>>, vector<1x1x3x128xf32>,
    return
  }
  func.func @transform_0(%arg0: i32, %arg1: i32) -> (i32, i32, i32) {
    %c0_i32 = arith.constant 0 : i32
    %c0_i32_0 = arith.constant 0 : i32
    return %arg0, %arg1, %c0_i32 : i32, i32, i32
  }
  func.func @transform_1(%arg0: i32, %arg1: i32) -> (i32, i32, i32) {
    %c0_i32 = arith.constant 0 : i32
    %c0_i32_0 = arith.constant 0 : i32
    return %arg0, %arg1, %c0_i32 : i32, i32, i32
  }
  func.func @transform_2(%arg0: i32, %arg1: i32) -> (i32, i32, i32, i32) {
    %c0_i32 = arith.constant 0 : i32
    %c0_i32_0 = arith.constant 0 : i32
    %c0_i32_1 = arith.constant 0 : i32
    return %arg0, %arg1, %c0_i32, %c0_i32_0 : i32, i32, i32, i32
  }
}

module attributes {stable_mosaic.version = 11 : i64} {
  func.func @_conv_kernel(%arg0: i32, %arg1: i32, %arg2: memref<1x128x128xf32, #tpu.memory_space<vmem>>, %arg3: memref<1x128x1xf32, #tpu.memory_space<vmem>>, %arg4: memref<1x1x8x1xf32, #tpu.memory_space<vmem>>, %arg5: memref<1x128xf32, #tpu.memory_space<vmem>>, %arg6: memref<1x128xf32, #tpu.memory_space<vmem>>, %arg7: memref<16x128xf32, #tpu.memory_space<vmem>>, %arg8: memref<1x4x128xf32, #tpu.memory_space<vmem>>, %arg9: memref<1x1x8x1xf32, #tpu.memory_space<vmem>>) attributes {dimension_semantics = [#tpu.dimension_semantics<parallel>, #tpu.dimension_semantics<parallel>], iteration_bounds = array<i64: 2, 1>, scalar_prefetch = 0 : i64, scratch_operands = 0 : i64, tpu.core_type = #tpu.core_type<tc>, window_params = [{transform_indices = @transform_0, window_bounds = array<i64: 1, 128, 128>}, {transform_indices = @transform_1, window_bounds = array<i64: 1, 128, 1>}, {transform_indices = @transform_2, window_bounds = array<i64: 1, 1, 8, 1>}, {pipeline_mode = #tpu.pipeline_mode<synchronous>, transform_indices = @transform_3, window_bounds = array<i64: 1, 128>}, {pipeline_mode = #tpu.pipeline_mode<synchronous>, transform_indices = @transform_4, window_bounds = array<i64: 1, 128>}, {pipeline_mode = #tpu.pipeline_mode<synchronous>, transform_indices = @transform_5, window_bounds = array<i64: 16, 128>}, {transform_indices = @transform_6, window_bounds = array<i64: 1, 4, 128>}, {transform_indices = @transform_7, window_bounds = array<i64: 1, 1, 8, 1>}]} {
    %0 = tpu.iota {dimensions = array<i32: 0>} : vector<128x1xi32>
    %c128_i32 = arith.constant 128 : i32
    %1 = arith.muli %arg1, %c128_i32 : i32
    %2 = vector.broadcast %1 : i32 to vector<128x1xi32>
    %3 = arith.addi %0, %2 : vector<128x1xi32>
    %c0 = arith.constant 0 : index
    %c0_0 = arith.constant 0 : index
    %c0_1 = arith.constant 0 : index
    %4 = vector.load %arg3[%c0, %c0_0, %c0_1] : memref<1x128x1xf32, #tpu.memory_space<vmem>>, vector<1x128x1xf32>
    %5 = vector.shape_cast %4 : vector<1x128x1xf32> to vector<128x1xf32>
    %cst = arith.constant 0.000000e+00 : f32
    %6 = vector.broadcast %cst : f32 to vector<128x1xf32>
    %7 = arith.cmpf ogt, %5, %6 : vector<128x1xf32>
    %c16_i32 = arith.constant 16 : i32
    %8 = vector.broadcast %c16_i32 : i32 to vector<128x1xi32>
    %9 = arith.cmpi slt, %3, %8 : vector<128x1xi32>
    %10 = arith.andi %7, %9 : vector<128x1xi1>
    %c0_2 = arith.constant 0 : index
    %c0_3 = arith.constant 0 : index
    %c0_4 = arith.constant 0 : index
    %11 = vector.load %arg2[%c0_2, %c0_3, %c0_4] : memref<1x128x128xf32, #tpu.memory_space<vmem>>, vector<1x128x128xf32>
    %12 = vector.shape_cast %11 : vector<1x128x128xf32> to vector<128x128xf32>
    %c0_5 = arith.constant 0 : index
    %c0_6 = arith.constant 0 : index
    %13 = vector.load %arg5[%c0_5, %c0_6] : memref<1x128xf32, #tpu.memory_space<vmem>>, vector<1x128xf32>
    %14 = vector.broadcast %13 : vector<1x128xf32> to vector<128x128xf32>
    %15 = arith.mulf %12, %14 : vector<128x128xf32>
    %c0_7 = arith.constant 0 : index
    %c0_8 = arith.constant 0 : index
    %16 = vector.load %arg6[%c0_7, %c0_8] : memref<1x128xf32, #tpu.memory_space<vmem>>, vector<1x128xf32>
    %17 = vector.broadcast %16 : vector<1x128xf32> to vector<128x128xf32>
    %18 = arith.addf %15, %17 : vector<128x128xf32>
    %cst_9 = arith.constant 0.000000e+00 : f32
    %19 = vector.shape_cast %10 : vector<128x1xi1> to vector<128x1xi1>
    %20 = vector.broadcast %19 : vector<128x1xi1> to vector<128x128xi1>
    %21 = vector.broadcast %cst_9 : f32 to vector<128x128xf32>
    %22 = arith.select %20, %18, %21 : vector<128x128xi1>, vector<128x128xf32>
    %c0_10 = arith.constant 0 : index
    %c0_11 = arith.constant 0 : index
    %23 = vector.load %arg7[%c0_10, %c0_11] : memref<16x128xf32, #tpu.memory_space<vmem>>, vector<16x128xf32>
    %cst_12 = arith.constant dense<0.000000e+00> : vector<16x128xf32>
    %24 = tpu.matmul %23, %22, %cst_12 {dimension_numbers = #tpu.dot_dimension_numbers<[1], [1], [0], [0], [0, 0, 1, 0], [], []>} : vector<16x128xf32>, vector<128x128xf32>, vector<16x128xf32> -> vector<16x128xf32>
    %c0_13 = arith.constant 0 : index
    %c0_14 = arith.constant 0 : index
    %c0_15 = arith.constant 0 : index
    %c0_16 = arith.constant 0 : index
    %25 = vector.load %arg4[%c0_13, %c0_14, %c0_15, %c0_16] : memref<1x1x8x1xf32, #tpu.memory_space<vmem>>, vector<1x1x8x1xf32>
    %26 = vector.shape_cast %25 : vector<1x1x8x1xf32> to vector<8x1xf32>
    %27 = vector.extract_strided_slice %26 {offsets = [0, 0], sizes = [4, 1], strides = [1, 1]} : vector<8x1xf32> to vector<4x1xf32>
    %28 = vector.extract_strided_slice %26 {offsets = [4, 0], sizes = [4, 1], strides = [1, 1]} : vector<8x1xf32> to vector<4x1xf32>
    %29 = tpu.iota {dimensions = array<i32: 1>} : vector<4x128xi32>
    %c127_i32 = arith.constant 127 : i32
    %30 = vector.broadcast %c127_i32 : i32 to vector<4x128xi32>
    %31 = arith.cmpi eq, %29, %30 : vector<4x128xi32>
    %32 = vector.extract_strided_slice %24 {offsets = [0, 0], sizes = [4, 128], strides = [1, 1]} : vector<16x128xf32> to vector<4x128xf32>
    %c127_i32_17 = arith.constant 127 : i32
    %33 = tpu.dynamic_rotate %32 by %c127_i32_17 dim 1 : vector<4x128xf32>, i32 -> vector<4x128xf32>
    %34 = vector.shape_cast %28 : vector<4x1xf32> to vector<4x1xf32>
    %35 = vector.broadcast %34 : vector<4x1xf32> to vector<4x128xf32>
    %36 = arith.select %31, %35, %33 : vector<4x128xi1>, vector<4x128xf32>
    %c0_i32 = arith.constant 0 : i32
    %37 = vector.broadcast %c0_i32 : i32 to vector<4x128xi32>
    %38 = arith.cmpi eq, %29, %37 : vector<4x128xi32>
    %39 = vector.extract_strided_slice %24 {offsets = [8, 0], sizes = [4, 128], strides = [1, 1]} : vector<16x128xf32> to vector<4x128xf32>
    %c1_i32 = arith.constant 1 : i32
    %40 = tpu.dynamic_rotate %39 by %c1_i32 dim 1 : vector<4x128xf32>, i32 -> vector<4x128xf32>
    %41 = vector.shape_cast %27 : vector<4x1xf32> to vector<4x1xf32>
    %42 = vector.broadcast %41 : vector<4x1xf32> to vector<4x128xf32>
    %43 = arith.select %38, %42, %40 : vector<4x128xi1>, vector<4x128xf32>
    %44 = vector.extract_strided_slice %24 {offsets = [4, 0], sizes = [4, 128], strides = [1, 1]} : vector<16x128xf32> to vector<4x128xf32>
    %45 = arith.addf %36, %44 : vector<4x128xf32>
    %46 = arith.addf %45, %43 : vector<4x128xf32>
    %c0_18 = arith.constant 0 : index
    %c0_19 = arith.constant 0 : index
    %c0_20 = arith.constant 0 : index
    %47 = vector.load %arg8[%c0_18, %c0_19, %c0_20] : memref<1x4x128xf32, #tpu.memory_space<vmem>>, vector<1x4x128xf32>
    %48 = vector.shape_cast %47 : vector<1x4x128xf32> to vector<4x128xf32>
    %49 = vector.shape_cast %46 : vector<4x128xf32> to vector<1x4x128xf32>
    tpu.vector_store %arg8[%c0_18, %c0_19, %c0_20], %49 {strides = array<i32>} : memref<1x4x128xf32, #tpu.memory_space<vmem>>, vector<1x4x128xf32>,
    %c128_i32_21 = arith.constant 128 : i32
    %50 = arith.muli %arg1, %c128_i32_21 : i32
    %51 = vector.broadcast %50 : i32 to vector<4x128xi32>
    %52 = arith.addi %29, %51 : vector<4x128xi32>
    %c16_i32_22 = arith.constant 16 : i32
    %53 = vector.broadcast %c16_i32_22 : i32 to vector<4x128xi32>
    %54 = arith.cmpi slt, %52, %53 : vector<4x128xi32>
    %cst_23 = arith.constant 0.000000e+00 : f32
    %55 = vector.broadcast %cst_23 : f32 to vector<4x128xf32>
    %56 = arith.select %54, %46, %55 : vector<4x128xi1>, vector<4x128xf32>
    %cst_24 = arith.constant dense<0.000000e+00> : vector<4xf32>
    %57 = vector.multi_reduction <add>, %56, %cst_24 [1] : vector<4x128xf32> to vector<4xf32>
    %58 = vector.shape_cast %57 : vector<4xf32> to vector<4x1xf32>
    %59 = arith.mulf %56, %56 : vector<4x128xf32>
    %cst_25 = arith.constant dense<0.000000e+00> : vector<4xf32>
    %60 = vector.multi_reduction <add>, %59, %cst_25 [1] : vector<4x128xf32> to vector<4xf32>
    %61 = vector.shape_cast %60 : vector<4xf32> to vector<4x1xf32>
    %62 = tpu.concatenate %58, %61 in 0 : vector<4x1xf32>, vector<4x1xf32> -> vector<8x1xf32>
    %c0_26 = arith.constant 0 : index
    %c0_27 = arith.constant 0 : index
    %c0_28 = arith.constant 0 : index
    %c0_29 = arith.constant 0 : index
    %63 = vector.load %arg9[%c0_26, %c0_27, %c0_28, %c0_29] : memref<1x1x8x1xf32, #tpu.memory_space<vmem>>, vector<1x1x8x1xf32>
    %64 = vector.shape_cast %63 : vector<1x1x8x1xf32> to vector<8x1xf32>
    %65 = vector.shape_cast %62 : vector<8x1xf32> to vector<1x1x8x1xf32>
    tpu.vector_store %arg9[%c0_26, %c0_27, %c0_28, %c0_29], %65 {strides = array<i32>} : memref<1x1x8x1xf32, #tpu.memory_space<vmem>>, vector<1x1x8x1xf32>,
    return
  }
  func.func @transform_0(%arg0: i32, %arg1: i32) -> (i32, i32, i32) {
    %c0_i32 = arith.constant 0 : i32
    %c0_i32_0 = arith.constant 0 : i32
    return %arg0, %arg1, %c0_i32 : i32, i32, i32
  }
  func.func @transform_1(%arg0: i32, %arg1: i32) -> (i32, i32, i32) {
    %c0_i32 = arith.constant 0 : i32
    %c0_i32_0 = arith.constant 0 : i32
    return %arg0, %arg1, %c0_i32 : i32, i32, i32
  }
  func.func @transform_2(%arg0: i32, %arg1: i32) -> (i32, i32, i32, i32) {
    %c0_i32 = arith.constant 0 : i32
    %c0_i32_0 = arith.constant 0 : i32
    %c0_i32_1 = arith.constant 0 : i32
    return %arg0, %arg1, %c0_i32, %c0_i32_0 : i32, i32, i32, i32
  }
  func.func @transform_3(%arg0: i32, %arg1: i32) -> (i32, i32) {
    %c0_i32 = arith.constant 0 : i32
    %c0_i32_0 = arith.constant 0 : i32
    %c0_i32_1 = arith.constant 0 : i32
    return %c0_i32, %c0_i32_0 : i32, i32
  }
  func.func @transform_4(%arg0: i32, %arg1: i32) -> (i32, i32) {
    %c0_i32 = arith.constant 0 : i32
    %c0_i32_0 = arith.constant 0 : i32
    %c0_i32_1 = arith.constant 0 : i32
    return %c0_i32, %c0_i32_0 : i32, i32
  }
  func.func @transform_5(%arg0: i32, %arg1: i32) -> (i32, i32) {
    %c0_i32 = arith.constant 0 : i32
    %c0_i32_0 = arith.constant 0 : i32
    %c0_i32_1 = arith.constant 0 : i32
    return %c0_i32, %c0_i32_0 : i32, i32
  }
  func.func @transform_6(%arg0: i32, %arg1: i32) -> (i32, i32, i32) {
    %c0_i32 = arith.constant 0 : i32
    %c0_i32_0 = arith.constant 0 : i32
    return %arg0, %c0_i32, %arg1 : i32, i32, i32
  }
  func.func @transform_7(%arg0: i32, %arg1: i32) -> (i32, i32, i32, i32) {
    %c0_i32 = arith.constant 0 : i32
    %c0_i32_0 = arith.constant 0 : i32
    %c0_i32_1 = arith.constant 0 : i32
    return %arg0, %arg1, %c0_i32, %c0_i32_0 : i32, i32, i32, i32
  }
}

module attributes {stable_mosaic.version = 11 : i64} {
  func.func @_head_kernel(%arg0: i32, %arg1: memref<1x4x16xf32, #tpu.memory_space<vmem>>, %arg2: memref<4x1xf32, #tpu.memory_space<vmem>>, %arg3: memref<4x1xf32, #tpu.memory_space<vmem>>, %arg4: memref<4x4xf32, #tpu.memory_space<smem>>, %arg5: memref<1x4x16xf32, #tpu.memory_space<vmem>>) attributes {dimension_semantics = [#tpu.dimension_semantics<parallel>], iteration_bounds = array<i64: 2>, scalar_prefetch = 0 : i64, scratch_operands = 0 : i64, tpu.core_type = #tpu.core_type<tc>, window_params = [{transform_indices = @transform_0, window_bounds = array<i64: 1, 4, 16>}, {pipeline_mode = #tpu.pipeline_mode<synchronous>, transform_indices = @transform_1, window_bounds = array<i64: 4, 1>}, {pipeline_mode = #tpu.pipeline_mode<synchronous>, transform_indices = @transform_2, window_bounds = array<i64: 4, 1>}, {transform_indices = @transform_3, window_bounds = array<i64: 4, 4>}, {transform_indices = @transform_4, window_bounds = array<i64: 1, 4, 16>}]} {
    %c0 = arith.constant 0 : index
    %c0_0 = arith.constant 0 : index
    %c0_1 = arith.constant 0 : index
    %0 = vector.load %arg1[%c0, %c0_0, %c0_1] : memref<1x4x16xf32, #tpu.memory_space<vmem>>, vector<1x4x16xf32>
    %1 = vector.shape_cast %0 : vector<1x4x16xf32> to vector<4x16xf32>
    %c0_2 = arith.constant 0 : index
    %c0_3 = arith.constant 0 : index
    %2 = vector.load %arg2[%c0_2, %c0_3] : memref<4x1xf32, #tpu.memory_space<vmem>>, vector<4x1xf32>
    %3 = vector.broadcast %2 : vector<4x1xf32> to vector<4x16xf32>
    %4 = arith.mulf %1, %3 : vector<4x16xf32>
    %c0_4 = arith.constant 0 : index
    %c0_5 = arith.constant 0 : index
    %5 = vector.load %arg3[%c0_4, %c0_5] : memref<4x1xf32, #tpu.memory_space<vmem>>, vector<4x1xf32>
    %6 = vector.broadcast %5 : vector<4x1xf32> to vector<4x16xf32>
    %7 = arith.addf %4, %6 : vector<4x16xf32>
    %8 = arith.negf %7 : vector<4x16xf32>
    %9 = math.exp %8 : vector<4x16xf32>
    %cst = arith.constant 1.000000e+00 : f32
    %10 = vector.broadcast %cst : f32 to vector<4x16xf32>
    %11 = arith.addf %10, %9 : vector<4x16xf32>
    %12 = arith.divf %10, %11 : vector<4x16xf32>
    %13 = arith.mulf %7, %12 : vector<4x16xf32>
    %c0_6 = arith.constant 0 : index
    %c0_7 = arith.constant 0 : index
    %14 = memref.load %arg4[%c0_6, %c0_7] : memref<4x4xf32, #tpu.memory_space<smem>>
    %15 = vector.extract_strided_slice %13 {offsets = [0, 0], sizes = [1, 16], strides = [1, 1]} : vector<4x16xf32> to vector<1x16xf32>
    %16 = vector.broadcast %14 : f32 to vector<1x16xf32>
    %17 = arith.mulf %16, %15 : vector<1x16xf32>
    %c1 = arith.constant 1 : index
    %c0_8 = arith.constant 0 : index
    %18 = memref.load %arg4[%c1, %c0_8] : memref<4x4xf32, #tpu.memory_space<smem>>
    %19 = vector.extract_strided_slice %13 {offsets = [1, 0], sizes = [1, 16], strides = [1, 1]} : vector<4x16xf32> to vector<1x16xf32>
    %20 = vector.broadcast %18 : f32 to vector<1x16xf32>
    %21 = arith.mulf %20, %19 : vector<1x16xf32>
    %22 = arith.addf %17, %21 : vector<1x16xf32>
    %c2 = arith.constant 2 : index
    %c0_9 = arith.constant 0 : index
    %23 = memref.load %arg4[%c2, %c0_9] : memref<4x4xf32, #tpu.memory_space<smem>>
    %24 = vector.extract_strided_slice %13 {offsets = [2, 0], sizes = [1, 16], strides = [1, 1]} : vector<4x16xf32> to vector<1x16xf32>
    %25 = vector.broadcast %23 : f32 to vector<1x16xf32>
    %26 = arith.mulf %25, %24 : vector<1x16xf32>
    %27 = arith.addf %22, %26 : vector<1x16xf32>
    %c3 = arith.constant 3 : index
    %c0_10 = arith.constant 0 : index
    %28 = memref.load %arg4[%c3, %c0_10] : memref<4x4xf32, #tpu.memory_space<smem>>
    %29 = vector.extract_strided_slice %13 {offsets = [3, 0], sizes = [1, 16], strides = [1, 1]} : vector<4x16xf32> to vector<1x16xf32>
    %30 = vector.broadcast %28 : f32 to vector<1x16xf32>
    %31 = arith.mulf %30, %29 : vector<1x16xf32>
    %32 = arith.addf %27, %31 : vector<1x16xf32>
    %c0_11 = arith.constant 0 : index
    %c0_12 = arith.constant 0 : index
    %c0_13 = arith.constant 0 : index
    %33 = vector.load %arg5[%c0_11, %c0_12, %c0_13] : memref<1x4x16xf32, #tpu.memory_space<vmem>>, vector<1x1x16xf32>
    %34 = vector.shape_cast %33 : vector<1x1x16xf32> to vector<1x16xf32>
    %35 = vector.shape_cast %32 : vector<1x16xf32> to vector<1x1x16xf32>
    tpu.vector_store %arg5[%c0_11, %c0_12, %c0_13], %35 {strides = array<i32>} : memref<1x4x16xf32, #tpu.memory_space<vmem>>, vector<1x1x16xf32>,
    %c0_14 = arith.constant 0 : index
    %c1_15 = arith.constant 1 : index
    %36 = memref.load %arg4[%c0_14, %c1_15] : memref<4x4xf32, #tpu.memory_space<smem>>
    %37 = vector.extract_strided_slice %13 {offsets = [0, 0], sizes = [1, 16], strides = [1, 1]} : vector<4x16xf32> to vector<1x16xf32>
    %38 = vector.broadcast %36 : f32 to vector<1x16xf32>
    %39 = arith.mulf %38, %37 : vector<1x16xf32>
    %c1_16 = arith.constant 1 : index
    %c1_17 = arith.constant 1 : index
    %40 = memref.load %arg4[%c1_16, %c1_17] : memref<4x4xf32, #tpu.memory_space<smem>>
    %41 = vector.extract_strided_slice %13 {offsets = [1, 0], sizes = [1, 16], strides = [1, 1]} : vector<4x16xf32> to vector<1x16xf32>
    %42 = vector.broadcast %40 : f32 to vector<1x16xf32>
    %43 = arith.mulf %42, %41 : vector<1x16xf32>
    %44 = arith.addf %39, %43 : vector<1x16xf32>
    %c2_18 = arith.constant 2 : index
    %c1_19 = arith.constant 1 : index
    %45 = memref.load %arg4[%c2_18, %c1_19] : memref<4x4xf32, #tpu.memory_space<smem>>
    %46 = vector.extract_strided_slice %13 {offsets = [2, 0], sizes = [1, 16], strides = [1, 1]} : vector<4x16xf32> to vector<1x16xf32>
    %47 = vector.broadcast %45 : f32 to vector<1x16xf32>
    %48 = arith.mulf %47, %46 : vector<1x16xf32>
    %49 = arith.addf %44, %48 : vector<1x16xf32>
    %c3_20 = arith.constant 3 : index
    %c1_21 = arith.constant 1 : index
    %50 = memref.load %arg4[%c3_20, %c1_21] : memref<4x4xf32, #tpu.memory_space<smem>>
    %51 = vector.extract_strided_slice %13 {offsets = [3, 0], sizes = [1, 16], strides = [1, 1]} : vector<4x16xf32> to vector<1x16xf32>
    %52 = vector.broadcast %50 : f32 to vector<1x16xf32>
    %53 = arith.mulf %52, %51 : vector<1x16xf32>
    %54 = arith.addf %49, %53 : vector<1x16xf32>
    %c0_22 = arith.constant 0 : index
    %c1_23 = arith.constant 1 : index
    %c0_24 = arith.constant 0 : index
    %55 = vector.load %arg5[%c0_22, %c1_23, %c0_24] : memref<1x4x16xf32, #tpu.memory_space<vmem>>, vector<1x1x16xf32>
    %56 = vector.shape_cast %55 : vector<1x1x16xf32> to vector<1x16xf32>
    %57 = vector.shape_cast %54 : vector<1x16xf32> to vector<1x1x16xf32>
    tpu.vector_store %arg5[%c0_22, %c1_23, %c0_24], %57 {strides = array<i32>} : memref<1x4x16xf32, #tpu.memory_space<vmem>>, vector<1x1x16xf32>,
    %c0_25 = arith.constant 0 : index
    %c2_26 = arith.constant 2 : index
    %58 = memref.load %arg4[%c0_25, %c2_26] : memref<4x4xf32, #tpu.memory_space<smem>>
    %59 = vector.extract_strided_slice %13 {offsets = [0, 0], sizes = [1, 16], strides = [1, 1]} : vector<4x16xf32> to vector<1x16xf32>
    %60 = vector.broadcast %58 : f32 to vector<1x16xf32>
    %61 = arith.mulf %60, %59 : vector<1x16xf32>
    %c1_27 = arith.constant 1 : index
    %c2_28 = arith.constant 2 : index
    %62 = memref.load %arg4[%c1_27, %c2_28] : memref<4x4xf32, #tpu.memory_space<smem>>
    %63 = vector.extract_strided_slice %13 {offsets = [1, 0], sizes = [1, 16], strides = [1, 1]} : vector<4x16xf32> to vector<1x16xf32>
    %64 = vector.broadcast %62 : f32 to vector<1x16xf32>
    %65 = arith.mulf %64, %63 : vector<1x16xf32>
    %66 = arith.addf %61, %65 : vector<1x16xf32>
    %c2_29 = arith.constant 2 : index
    %c2_30 = arith.constant 2 : index
    %67 = memref.load %arg4[%c2_29, %c2_30] : memref<4x4xf32, #tpu.memory_space<smem>>
    %68 = vector.extract_strided_slice %13 {offsets = [2, 0], sizes = [1, 16], strides = [1, 1]} : vector<4x16xf32> to vector<1x16xf32>
    %69 = vector.broadcast %67 : f32 to vector<1x16xf32>
    %70 = arith.mulf %69, %68 : vector<1x16xf32>
    %71 = arith.addf %66, %70 : vector<1x16xf32>
    %c3_31 = arith.constant 3 : index
    %c2_32 = arith.constant 2 : index
    %72 = memref.load %arg4[%c3_31, %c2_32] : memref<4x4xf32, #tpu.memory_space<smem>>
    %73 = vector.extract_strided_slice %13 {offsets = [3, 0], sizes = [1, 16], strides = [1, 1]} : vector<4x16xf32> to vector<1x16xf32>
    %74 = vector.broadcast %72 : f32 to vector<1x16xf32>
    %75 = arith.mulf %74, %73 : vector<1x16xf32>
    %76 = arith.addf %71, %75 : vector<1x16xf32>
    %c0_33 = arith.constant 0 : index
    %c2_34 = arith.constant 2 : index
    %c0_35 = arith.constant 0 : index
    %77 = vector.load %arg5[%c0_33, %c2_34, %c0_35] : memref<1x4x16xf32, #tpu.memory_space<vmem>>, vector<1x1x16xf32>
    %78 = vector.shape_cast %77 : vector<1x1x16xf32> to vector<1x16xf32>
    %79 = vector.shape_cast %76 : vector<1x16xf32> to vector<1x1x16xf32>
    tpu.vector_store %arg5[%c0_33, %c2_34, %c0_35], %79 {strides = array<i32>} : memref<1x4x16xf32, #tpu.memory_space<vmem>>, vector<1x1x16xf32>,
    %c0_36 = arith.constant 0 : index
    %c3_37 = arith.constant 3 : index
    %80 = memref.load %arg4[%c0_36, %c3_37] : memref<4x4xf32, #tpu.memory_space<smem>>
    %81 = vector.extract_strided_slice %13 {offsets = [0, 0], sizes = [1, 16], strides = [1, 1]} : vector<4x16xf32> to vector<1x16xf32>
    %82 = vector.broadcast %80 : f32 to vector<1x16xf32>
    %83 = arith.mulf %82, %81 : vector<1x16xf32>
    %c1_38 = arith.constant 1 : index
    %c3_39 = arith.constant 3 : index
    %84 = memref.load %arg4[%c1_38, %c3_39] : memref<4x4xf32, #tpu.memory_space<smem>>
    %85 = vector.extract_strided_slice %13 {offsets = [1, 0], sizes = [1, 16], strides = [1, 1]} : vector<4x16xf32> to vector<1x16xf32>
    %86 = vector.broadcast %84 : f32 to vector<1x16xf32>
    %87 = arith.mulf %86, %85 : vector<1x16xf32>
    %88 = arith.addf %83, %87 : vector<1x16xf32>
    %c2_40 = arith.constant 2 : index
    %c3_41 = arith.constant 3 : index
    %89 = memref.load %arg4[%c2_40, %c3_41] : memref<4x4xf32, #tpu.memory_space<smem>>
    %90 = vector.extract_strided_slice %13 {offsets = [2, 0], sizes = [1, 16], strides = [1, 1]} : vector<4x16xf32> to vector<1x16xf32>
    %91 = vector.broadcast %89 : f32 to vector<1x16xf32>
    %92 = arith.mulf %91, %90 : vector<1x16xf32>
    %93 = arith.addf %88, %92 : vector<1x16xf32>
    %c3_42 = arith.constant 3 : index
    %c3_43 = arith.constant 3 : index
    %94 = memref.load %arg4[%c3_42, %c3_43] : memref<4x4xf32, #tpu.memory_space<smem>>
    %95 = vector.extract_strided_slice %13 {offsets = [3, 0], sizes = [1, 16], strides = [1, 1]} : vector<4x16xf32> to vector<1x16xf32>
    %96 = vector.broadcast %94 : f32 to vector<1x16xf32>
    %97 = arith.mulf %96, %95 : vector<1x16xf32>
    %98 = arith.addf %93, %97 : vector<1x16xf32>
    %c0_44 = arith.constant 0 : index
    %c3_45 = arith.constant 3 : index
    %c0_46 = arith.constant 0 : index
    %99 = vector.load %arg5[%c0_44, %c3_45, %c0_46] : memref<1x4x16xf32, #tpu.memory_space<vmem>>, vector<1x1x16xf32>
    %100 = vector.shape_cast %99 : vector<1x1x16xf32> to vector<1x16xf32>
    %101 = vector.shape_cast %98 : vector<1x16xf32> to vector<1x1x16xf32>
    tpu.vector_store %arg5[%c0_44, %c3_45, %c0_46], %101 {strides = array<i32>} : memref<1x4x16xf32, #tpu.memory_space<vmem>>, vector<1x1x16xf32>,
    return
  }
  func.func @transform_0(%arg0: i32) -> (i32, i32, i32) {
    %c0_i32 = arith.constant 0 : i32
    %c0_i32_0 = arith.constant 0 : i32
    %c0_i32_1 = arith.constant 0 : i32
    return %arg0, %c0_i32, %c0_i32_0 : i32, i32, i32
  }
  func.func @transform_1(%arg0: i32) -> (i32, i32) {
    %c0_i32 = arith.constant 0 : i32
    %c0_i32_0 = arith.constant 0 : i32
    %c0_i32_1 = arith.constant 0 : i32
    return %c0_i32, %c0_i32_0 : i32, i32
  }
  func.func @transform_2(%arg0: i32) -> (i32, i32) {
    %c0_i32 = arith.constant 0 : i32
    %c0_i32_0 = arith.constant 0 : i32
    %c0_i32_1 = arith.constant 0 : i32
    return %c0_i32, %c0_i32_0 : i32, i32
  }
  func.func @transform_3(%arg0: i32) -> (i32, i32) {
    %c0_i32 = arith.constant 0 : i32
    %c0_i32_0 = arith.constant 0 : i32
    %c0_i32_1 = arith.constant 0 : i32
    return %c0_i32, %c0_i32_0 : i32, i32
  }
  func.func @transform_4(%arg0: i32) -> (i32, i32, i32) {
    %c0_i32 = arith.constant 0 : i32
    %c0_i32_0 = arith.constant 0 : i32
    %c0_i32_1 = arith.constant 0 : i32
    return %arg0, %c0_i32, %c0_i32_0 : i32, i32, i32
  }
}

</mosaic_0001>

<llo_original>
// kernel: tile.18
$region0: #{tile.18}
  #allocation0 [shape = 's32[1]{0}', space=sflag, size = 0x4, scoped, tag = 'scoped memory for tile.18']
  %s0 = inlined_call_operand.vmem [shape: f32[2], index: 0, kind: input, shape index: {}]
  %s1 = inlined_call_operand.vmem [shape: f32[2,2], index: 1, kind: output, shape index: {}]
  // Predicated region
  $region2: #{tile.18} parent=0 // pred_check
    _
  $region3: #{tile.18} parent=0 // pred_check_branch
    %3 = sbr.rel (0) target = $region5
  $region4: #{tile.18} parent=0 // pred_region
    _
  $region5: #{tile.18} parent=0 // pred_fallthru
    _
  %v4 = vld [vmem:[%s0] ss:$0 sm:$0xff]
  %5 = vst [vmem:[%s1] sm:$0x3] %v4

// kernel: tile.1
$region0: #{tile.1}
  %s0 = inlined_call_operand.vmem [shape: f32[2,2], index: 0, kind: input, shape index: {}]
  %s1 = inlined_call_operand.vmem [shape: f32[4,1], index: 1, kind: output, shape index: {}]
  $region1: #{tile.1} parent=0
    #allocation0 [shape = 'u8[4096]{0}', space=vmem, size = 0x1000, scoped, tag = 'scoped mem for output reshape']
    #allocation1 [shape = 'u8[4096]{0}', space=vmem, size = 0x1000, scoped, tag = 'scoped mem for input reshape']
    %s3 = ssub.s32 4, 1
    %v4 = vld [vmem:[%s0] sm:%s3]
    %5 = vst [vmem:[#allocation1] sm:%s3] %v4
    %v6 = vld [vmem:[#allocation1] sm:$0x3]
    %vm7 = vcmask 7168
    %8 = vst.msk [vmem:[#allocation0] ss:$2 sm:$0x3] %vm7, %v6
    %v9 = vld [vmem:[#allocation1] sm:$0x3]
    %10 = vrot.lane.b32.xlu0 %v9, 127
    %v11 = vpop.permute.xlu0 %10
    %vm12 = vcmask 7168
    %s13 = scalar_lea.vmem [#allocation0], 1
    %14 = vst.msk [vmem:[%s13] ss:$2 sm:$0x3] %vm12, %v11
    %s16 = ssub.s32 16, 1
    %v17 = vld [vmem:[#allocation0] sm:%s16]
    %s19 = ssub.s32 16, 1
    %20 = vst [vmem:[%s1] sm:%s19] %v17

// kernel: _lambda_.3
$region0: #{_lambda_.3}
  #allocation0 [shape = 'u32[]', space=smem, size = 0x4, offset = 0x4, fixed_abs, tag = 'smem constant byte address 0x4 - core index']
  #allocation1 [shape = 'u32[72,128]{1,0:T(1,128)}', space=vmem, size = 0x9000, scoped, tag = 'internal scratch']
  %s0 = inlined_call_operand.vmem [shape: f32[2,16,128], index: 0, kind: input, shape index: {}]
  %s1 = inlined_call_operand.vmem [shape: f32[2,16,1], index: 1, kind: input, shape index: {}]
  %s2 = inlined_call_operand.vmem [shape: f32[2,1,3,128], index: 2, kind: output, shape index: {}]
  %s3 = sld [smem:[#allocation0]]
  $region41: #{_lambda_.3} parent=0
    _
  %s5 = ssub.s32 1, %s3
  %s6 = scalar_select 0, %s5, %s3
  loop: start=0, step=1, limit=4
  $region2: #{_lambda_.3} parent=0 // loop_pre_header
    _
  $region3: #{_lambda_.3} parent=0 // loop_header
    %s8 = sphi 0, %s12
    %p9 = scmp.ge.s32.totalorder %s8, 4
    %s15 = sphi 0, %s27
    %s16 = sphi 0, %s23
    %s17 = sphi 0, %s15
    %s18 = sphi 0, %s16
    %s19 = sphi 0, %s17
    %s20 = sphi 0, %s18
    %s32 = sphi 0, %s34
    %s35 = sphi 0, %s32
    %s36 = sphi 0, %s35
    %s52 = sphi 0, %s36
    %s60 = sphi 0, %s62
    %s63 = sphi 0, %s60
    %s64 = sphi 0, %s63
    %s80 = sphi 0, %s64
    %s88 = sphi 0, %s90
    %s91 = sphi 0, %s88
    %s92 = sphi 0, %s91
    %s108 = sphi 0, %s92
  $region4: #{_lambda_.3} parent=0 // loop_header_branch
    %11 = sbr.rel (%p9) target = $region8
  $region5: #{_lambda_.3} parent=0 // loop_body
    %s13 = ssub.s32 %s8, 1
    %s14 = ssub.s32 %s8, 2
    %s21 = sadd.s32 1, %s16
    %p22 = scmp.ge.s32.totalorder %s21, 1
    %s23 = scalar_select %p22, 0, %s21
    %s24 = sadd.s32 1, %s15
    %s25 = scalar_select %p22, %s24, %s15
    %p26 = scmp.ge.s32.totalorder %s25, 2
    %s27 = scalar_select %p26, 0, %s25
    %s28 = ssub.s32 %s15, %s27
    %s29 = ssub.s32 %s16, %s23
    %s30 = sor.u32 %s28, %s29
    %p31 = scmp.eq.s32.totalorder %s30, 0
    %s33 = sadd.s32 %s32, 1
    %s34 = scalar_select %p31, %s32, %s33
    %p37 = pneg %p31
    %p38 = scmp.eq.s32.totalorder %s8, 1
    %p39 = por %p37, %p38
    %p40 = scmp.ne.s32.totalorder %s32, %s35
    %p41 = scmp.eq.s32.totalorder %s8, 0
    %p42 = por %p40, %p41
    %p43 = scmp.ne.s32.totalorder %s32, %s35
    %p44 = scmp.eq.s32.totalorder %s13, 1
    %p45 = por %p43, %p44
    %p46 = scmp.ne.s32.totalorder %s35, %s36
    %p47 = scmp.eq.s32.totalorder %s13, 0
    %p48 = por %p46, %p47
    %p49 = scmp.ne.s32.totalorder %s35, %s36
    %p50 = scmp.eq.s32.totalorder %s14, 1
    %p51 = por %p49, %p50
    %p53 = scmp.ne.s32.totalorder %s36, %s52
    %p54 = scmp.eq.s32.totalorder %s14, 0
    %p55 = por %p53, %p54
    %s56 = ssub.s32 %s15, %s27
    %s57 = ssub.s32 %s16, %s23
    %s58 = sor.u32 %s56, %s57
    %p59 = scmp.eq.s32.totalorder %s58, 0
    %s61 = sadd.s32 %s60, 1
    %s62 = scalar_select %p59, %s60, %s61
    %p65 = pneg %p59
    %p66 = scmp.eq.s32.totalorder %s8, 1
    %p67 = por %p65, %p66
    %p68 = scmp.ne.s32.totalorder %s60, %s63
    %p69 = scmp.eq.s32.totalorder %s8, 0
    %p70 = por %p68, %p69
    %p71 = scmp.ne.s32.totalorder %s60, %s63
    %p72 = scmp.eq.s32.totalorder %s13, 1
    %p73 = por %p71, %p72
    %p74 = scmp.ne.s32.totalorder %s63, %s64
    %p75 = scmp.eq.s32.totalorder %s13, 0
    %p76 = por %p74, %p75
    %p77 = scmp.ne.s32.totalorder %s63, %s64
    %p78 = scmp.eq.s32.totalorder %s14, 1
    %p79 = por %p77, %p78
    %p81 = scmp.ne.s32.totalorder %s64, %s80
    %p82 = scmp.eq.s32.totalorder %s14, 0
    %p83 = por %p81, %p82
    %s84 = ssub.s32 %s15, %s27
    %s85 = ssub.s32 %s16, %s23
    %s86 = sor.u32 %s84, %s85
    %p87 = scmp.eq.s32.totalorder %s86, 0
    %s89 = sadd.s32 %s88, 1
    %s90 = scalar_select %p87, %s88, %s89
    %p93 = pneg %p87
    %p94 = scmp.eq.s32.totalorder %s8, 1
    %p95 = por %p93, %p94
    %p96 = scmp.ne.s32.totalorder %s88, %s91
    %p97 = scmp.eq.s32.totalorder %s8, 0
    %p98 = por %p96, %p97
    %p99 = scmp.ne.s32.totalorder %s88, %s91
    %p100 = scmp.eq.s32.totalorder %s13, 1
    %p101 = por %p99, %p100
    %p102 = scmp.ne.s32.totalorder %s91, %s92
    %p103 = scmp.eq.s32.totalorder %s13, 0
    %p104 = por %p102, %p103
    %p105 = scmp.ne.s32.totalorder %s91, %s92
    %p106 = scmp.eq.s32.totalorder %s14, 1
    %p107 = por %p105, %p106
    %p109 = scmp.ne.s32.totalorder %s92, %s108
    %p110 = scmp.eq.s32.totalorder %s14, 0
    %p111 = por %p109, %p110
    %p112 = scmp.le.s32.totalorder 1, %s8
    %p113 = scmp.lt.s32.totalorder %s8, 3
    %p114 = pnand %p112, %p113
    %p115 = pneg %p114
    // Predicated region
    $region9: #{_lambda_.3} parent=5 // pred_check
      _
    $region10: #{_lambda_.3} parent=5 // pred_check_branch
      %117 = sbr.rel (%p114) target = $region12
    $region11: #{_lambda_.3} parent=5 // pred_region
      %s118 = ssub.s32 %s8, 1
    $region12: #{_lambda_.3} parent=5 // pred_fallthru
      _
    %p119 = scmp.lt.s32.totalorder %s8, 2
    // Predicated region
    $region13: #{_lambda_.3} parent=5 // pred_check
      %p120 = pneg %p119
    $region14: #{_lambda_.3} parent=5 // pred_check_branch
      %122 = sbr.rel (%p120) target = $region16
    $region15: #{_lambda_.3} parent=5 // pred_region
      // Predicated region
      $region17: #{_lambda_.3} parent=15 // pred_check
        %p123 = pneg %p42
      $region18: #{_lambda_.3} parent=15 // pred_check_branch
        %125 = sbr.rel (%p123) target = $region20
      $region19: #{_lambda_.3} parent=15 // pred_region
        %s126 = smul.u32 16, %s16
        %s127 = ssub.s32 2, %s126
        %s128 = smul.u32 8, %s127
        %p129 = scmp.lt.s32.totalorder %s15, 1
        %s130 = scalar_select %p129, %s15, 1
        %p131 = scmp.lt.s32.totalorder %s126, 1
        %s132 = scalar_select %p131, %s126, 1
        %s133 = smul.addr %s130, 2
        %s134 = sadd.s32 %s132, %s133
        %s135 = smul.addr %s134, 8
        %s136 = scalar_lea.vmem %s0, %s135
        %s137 = smul.u32 16, %s16
        %s138 = ssub.s32 2, %s137
        %s139 = smul.u32 8, %s138
      $region20: #{_lambda_.3} parent=15 // pred_fallthru
        _
      // Predicated region
      $region21: #{_lambda_.3} parent=15 // pred_check
        %p140 = pneg %p70
      $region22: #{_lambda_.3} parent=15 // pred_check_branch
        %142 = sbr.rel (%p140) target = $region24
      $region23: #{_lambda_.3} parent=15 // pred_region
        %s143 = smul.u32 16, %s16
        %s144 = ssub.s32 2, %s143
        %s145 = smul.u32 8, %s144
        %p146 = scmp.lt.s32.totalorder %s15, 1
        %s147 = scalar_select %p146, %s15, 1
        %p148 = scmp.lt.s32.totalorder %s143, 1
        %s149 = scalar_select %p148, %s143, 1
        %s150 = smul.addr %s147, 2
        %s151 = sadd.s32 %s149, %s150
        %s152 = smul.addr %s151, 8
        %s153 = scalar_lea.vmem %s1, %s152
        %s154 = smul.u32 16, %s16
        %s155 = ssub.s32 2, %s154
        %s156 = smul.u32 8, %s155
      $region24: #{_lambda_.3} parent=15 // pred_fallthru
        _
    $region16: #{_lambda_.3} parent=5 // pred_fallthru
      _
    %p157 = scmp.le.s32.totalorder 1, %s8
    %p158 = scmp.lt.s32.totalorder %s8, 3
    %p159 = pnand %p157, %p158
    %p160 = pneg %p159
    // Predicated region
    $region25: #{_lambda_.3} parent=5 // pred_check
      _
    $region26: #{_lambda_.3} parent=5 // pred_check_branch
      %162 = sbr.rel (%p159) target = $region28
    $region27: #{_lambda_.3} parent=5 // pred_region
      %s163 = ssub.s32 %s8, 1
      %s164 = smul.u32 16, %s18
      %s165 = ssub.s32 2, %s164
      %s166 = smul.u32 8, %s165
      %p167 = scmp.lt.s32.totalorder %s17, 1
      %s168 = scalar_select %p167, %s17, 1
      %p169 = scmp.lt.s32.totalorder %s164, 1
      %s170 = scalar_select %p169, %s164, 1
      %s171 = smul.addr %s168, 2
      %s172 = sadd.s32 %s170, %s171
      %s173 = smul.addr %s172, 8
      %s174 = scalar_lea.vmem %s0, %s173
      %p175 = pneg %p48
      %p176 = pneg %p45
      %s177 = smul.u32 16, %s18
      %s178 = ssub.s32 2, %s177
      %s179 = smul.u32 8, %s178
      %p180 = scmp.lt.s32.totalorder %s17, 1
      %s181 = scalar_select %p180, %s17, 1
      %p182 = scmp.lt.s32.totalorder %s177, 1
      %s183 = scalar_select %p182, %s177, 1
      %s184 = smul.addr %s181, 2
      %s185 = sadd.s32 %s183, %s184
      %s186 = smul.addr %s185, 8
      %s187 = scalar_lea.vmem %s1, %s186
      %p188 = pneg %p76
      %p189 = pneg %p73
      %p190 = pneg %p104
      %p191 = pneg %p101
      %p192 = scmp.lt.s32.totalorder %s17, 1
      %s193 = scalar_select %p192, %s17, 1
      %p194 = scmp.lt.s32.totalorder %s18, 0
      %s195 = scalar_select %p194, %s18, 0
      %s196 = sadd.s32 %s195, %s193
      %s197 = smul.addr %s196, 4
      %s198 = scalar_lea.vmem %s2, %s197
      %s199 = smul.u32 16, %s18
      %s200 = ssub.s32 2, %s199
      %s201 = smul.u32 8, %s200
      %p202 = scmp.lt.s32.totalorder %s17, 1
      %s203 = scalar_select %p202, %s17, 1
      %p204 = scmp.lt.s32.totalorder %s199, 1
      %s205 = scalar_select %p204, %s199, 1
      %s206 = smul.addr %s203, 2
      %s207 = sadd.s32 %s205, %s206
      %s208 = smul.addr %s207, 8
      %s209 = scalar_lea.vmem %s0, %s208
      %s210 = smul.u32 16, %s18
      %s211 = ssub.s32 2, %s210
      %s212 = smul.u32 8, %s211
      %s213 = smul.u32 16, %s18
      %s214 = ssub.s32 2, %s213
      %s215 = smul.u32 8, %s214
      %p216 = scmp.lt.s32.totalorder %s17, 1
      %s217 = scalar_select %p216, %s17, 1
      %p218 = scmp.lt.s32.totalorder %s213, 1
      %s219 = scalar_select %p218, %s213, 1
      %s220 = smul.addr %s217, 2
      %s221 = sadd.s32 %s219, %s220
      %s222 = smul.addr %s221, 8
      %s223 = scalar_lea.vmem %s1, %s222
      %s224 = smul.u32 16, %s18
      %s225 = ssub.s32 2, %s224
      %s226 = smul.u32 8, %s225
      %p227 = scmp.lt.s32.totalorder %s17, 1
      %s228 = scalar_select %p227, %s17, 1
      %p229 = scmp.lt.s32.totalorder %s18, 0
      %s230 = scalar_select %p229, %s18, 0
      %s231 = sadd.s32 %s230, %s228
      %s232 = smul.addr %s231, 4
      %s233 = scalar_lea.vmem %s2, %s232
      %v234 = vld [vmem:[%s209] sm:$0xff]
      %v235 = vld [vmem:[%s209 + $0x8] sm:$0xff]
      %v236 = vld [vmem:[%s209 + $0x10] sm:$0xff]
      %v237 = vld [vmem:[%s209 + $0x18] sm:$0xff]
      %v238 = vld [vmem:[%s209 + $0x20] sm:$0xff]
      %v239 = vld [vmem:[%s209 + $0x28] sm:$0xff]
      %v240 = vld [vmem:[%s209 + $0x30] sm:$0xff]
      %v241 = vld [vmem:[%s209 + $0x38] sm:$0xff]
      %v242 = vld [vmem:[%s209 + $0x40] sm:$0xff]
      %v243 = vld [vmem:[%s209 + $0x48] sm:$0xff]
      %v244 = vld [vmem:[%s209 + $0x50] sm:$0xff]
      %v245 = vld [vmem:[%s209 + $0x58] sm:$0xff]
      %v246 = vld [vmem:[%s209 + $0x60] sm:$0xff]
      %v247 = vld [vmem:[%s209 + $0x68] sm:$0xff]
      %v248 = vld [vmem:[%s209 + $0x70] sm:$0xff]
      %v249 = vld [vmem:[%s209 + $0x78] sm:$0xff]
      %v250 = vlaneseq
      %v251 = vshrl.u32 %v250, 7
      %v252 = vadd.s32 %v251, 8
      %v253 = vadd.s32 %v251, 16
      %v254 = vadd.s32 %v251, 24
      %v255 = vadd.s32 %v251, 32
      %v256 = vadd.s32 %v251, 40
      %v257 = vadd.s32 %v251, 48
      %v258 = vadd.s32 %v251, 56
      %v259 = vadd.s32 %v251, 64
      %v260 = vadd.s32 %v251, 72
      %v261 = vadd.s32 %v251, 80
      %v262 = vadd.s32 %v251, 88
      %v263 = vadd.s32 %v251, 96
      %v264 = vadd.s32 %v251, 104
      %v265 = vadd.s32 %v251, 112
      %v266 = vadd.s32 %v251, 120
      %s267 = smul.u32 %s18, 128
      %v268 = vstv %s267
      %v269 = vadd.s32 %v251, %v268
      %v270 = vadd.s32 %v252, %v268
      %v271 = vadd.s32 %v253, %v268
      %v272 = vadd.s32 %v254, %v268
      %v273 = vadd.s32 %v255, %v268
      %v274 = vadd.s32 %v256, %v268
      %v275 = vadd.s32 %v257, %v268
      %v276 = vadd.s32 %v258, %v268
      %v277 = vadd.s32 %v259, %v268
      %v278 = vadd.s32 %v260, %v268
      %v279 = vadd.s32 %v261, %v268
      %v280 = vadd.s32 %v262, %v268
      %v281 = vadd.s32 %v263, %v268
      %v282 = vadd.s32 %v264, %v268
      %v283 = vadd.s32 %v265, %v268
      %v284 = vadd.s32 %v266, %v268
      %v285 = vld [vmem:[%s223] sm:$0xff]
      %v286 = vld [vmem:[%s223 + $0x8] sm:$0xff]
      %v287 = vld [vmem:[%s223 + $0x10] sm:$0xff]
      %v288 = vld [vmem:[%s223 + $0x18] sm:$0xff]
      %v289 = vld [vmem:[%s223 + $0x20] sm:$0xff]
      %v290 = vld [vmem:[%s223 + $0x28] sm:$0xff]
      %v291 = vld [vmem:[%s223 + $0x30] sm:$0xff]
      %v292 = vld [vmem:[%s223 + $0x38] sm:$0xff]
      %v293 = vld [vmem:[%s223 + $0x40] sm:$0xff]
      %v294 = vld [vmem:[%s223 + $0x48] sm:$0xff]
      %v295 = vld [vmem:[%s223 + $0x50] sm:$0xff]
      %v296 = vld [vmem:[%s223 + $0x58] sm:$0xff]
      %v297 = vld [vmem:[%s223 + $0x60] sm:$0xff]
      %v298 = vld [vmem:[%s223 + $0x68] sm:$0xff]
      %v299 = vld [vmem:[%s223 + $0x70] sm:$0xff]
      %v300 = vld [vmem:[%s223 + $0x78] sm:$0xff]
      %vm301 = vcmp.gt.f32.partialorder %v285, 0.0
      %vm302 = vcmp.gt.f32.partialorder %v286, 0.0
      %vm303 = vcmp.gt.f32.partialorder %v287, 0.0
      %vm304 = vcmp.gt.f32.partialorder %v288, 0.0
      %vm305 = vcmp.gt.f32.partialorder %v289, 0.0
      %vm306 = vcmp.gt.f32.partialorder %v290, 0.0
      %vm307 = vcmp.gt.f32.partialorder %v291, 0.0
      %vm308 = vcmp.gt.f32.partialorder %v292, 0.0
      %vm309 = vcmp.gt.f32.partialorder %v293, 0.0
      %vm310 = vcmp.gt.f32.partialorder %v294, 0.0
      %vm311 = vcmp.gt.f32.partialorder %v295, 0.0
      %vm312 = vcmp.gt.f32.partialorder %v296, 0.0
      %vm313 = vcmp.gt.f32.partialorder %v297, 0.0
      %vm314 = vcmp.gt.f32.partialorder %v298, 0.0
      %vm315 = vcmp.gt.f32.partialorder %v299, 0.0
      %vm316 = vcmp.gt.f32.partialorder %v300, 0.0
      %vm317 = vcmp.lt.s32.totalorder %v269, 16
      %vm318 = vcmp.lt.s32.totalorder %v270, 16
      %vm319 = vcmp.lt.s32.totalorder %v271, 16
      %vm320 = vcmp.lt.s32.totalorder %v272, 16
      %vm321 = vcmp.lt.s32.totalorder %v273, 16
      %vm322 = vcmp.lt.s32.totalorder %v274, 16
      %vm323 = vcmp.lt.s32.totalorder %v275, 16
      %vm324 = vcmp.lt.s32.totalorder %v276, 16
      %vm325 = vcmp.lt.s32.totalorder %v277, 16
      %vm326 = vcmp.lt.s32.totalorder %v278, 16
      %vm327 = vcmp.lt.s32.totalorder %v279, 16
      %vm328 = vcmp.lt.s32.totalorder %v280, 16
      %vm329 = vcmp.lt.s32.totalorder %v281, 16
      %vm330 = vcmp.lt.s32.totalorder %v282, 16
      %vm331 = vcmp.lt.s32.totalorder %v283, 16
      %vm332 = vcmp.lt.s32.totalorder %v284, 16
      %vm333 = vmand %vm301, %vm317
      %vm334 = vmand %vm302, %vm318
      %vm335 = vmand %vm303, %vm319
      %vm336 = vmand %vm304, %vm320
      %vm337 = vmand %vm305, %vm321
      %vm338 = vmand %vm306, %vm322
      %vm339 = vmand %vm307, %vm323
      %vm340 = vmand %vm308, %vm324
      %vm341 = vmand %vm309, %vm325
      %vm342 = vmand %vm310, %vm326
      %vm343 = vmand %vm311, %vm327
      %vm344 = vmand %vm312, %vm328
      %vm345 = vmand %vm313, %vm329
      %vm346 = vmand %vm314, %vm330
      %vm347 = vmand %vm315, %vm331
      %vm348 = vmand %vm316, %vm332
      %v349 = vsel %vm333, 1, 0
      %v350 = vsel %vm334, 1, 0
      %v351 = vsel %vm335, 1, 0
      %v352 = vsel %vm336, 1, 0
      %v353 = vsel %vm337, 1, 0
      %v354 = vsel %vm338, 1, 0
      %v355 = vsel %vm339, 1, 0
      %v356 = vsel %vm340, 1, 0
      %v357 = vsel %vm341, 1, 0
      %v358 = vsel %vm342, 1, 0
      %v359 = vsel %vm343, 1, 0
      %v360 = vsel %vm344, 1, 0
      %v361 = vsel %vm345, 1, 0
      %v362 = vsel %vm346, 1, 0
      %v363 = vsel %vm347, 1, 0
      %v364 = vsel %vm348, 1, 0
      %365 = vset.pattern.permute.xlu0 0
      %366 = vperm.xlu0 %365, %v349
      %v367 = vpop.permute.xlu0 %366
      %368 = vset.pattern.permute.xlu0 0
      %369 = vperm.xlu0 %368, %v350
      %v370 = vpop.permute.xlu0 %369
      %371 = vset.pattern.permute.xlu0 0
      %372 = vperm.xlu0 %371, %v351
      %v373 = vpop.permute.xlu0 %372
      %374 = vset.pattern.permute.xlu0 0
      %375 = vperm.xlu0 %374, %v352
      %v376 = vpop.permute.xlu0 %375
      %377 = vset.pattern.permute.xlu0 0
      %378 = vperm.xlu0 %377, %v353
      %v379 = vpop.permute.xlu0 %378
      %380 = vset.pattern.permute.xlu0 0
      %381 = vperm.xlu0 %380, %v354
      %v382 = vpop.permute.xlu0 %381
      %383 = vset.pattern.permute.xlu0 0
      %384 = vperm.xlu0 %383, %v355
      %v385 = vpop.permute.xlu0 %384
      %386 = vset.pattern.permute.xlu0 0
      %387 = vperm.xlu0 %386, %v356
      %v388 = vpop.permute.xlu0 %387
      %389 = vset.pattern.permute.xlu0 0
      %390 = vperm.xlu0 %389, %v357
      %v391 = vpop.permute.xlu0 %390
      %392 = vset.pattern.permute.xlu0 0
      %393 = vperm.xlu0 %392, %v358
      %v394 = vpop.permute.xlu0 %393
      %395 = vset.pattern.permute.xlu0 0
      %396 = vperm.xlu0 %395, %v359
      %v397 = vpop.permute.xlu0 %396
      %398 = vset.pattern.permute.xlu0 0
      %399 = vperm.xlu0 %398, %v360
      %v400 = vpop.permute.xlu0 %399
      %401 = vset.pattern.permute.xlu0 0
      %402 = vperm.xlu0 %401, %v361
      %v403 = vpop.permute.xlu0 %402
      %404 = vset.pattern.permute.xlu0 0
      %405 = vperm.xlu0 %404, %v362
      %v406 = vpop.permute.xlu0 %405
      %407 = vset.pattern.permute.xlu0 0
      %408 = vperm.xlu0 %407, %v363
      %v409 = vpop.permute.xlu0 %408
      %410 = vset.pattern.permute.xlu0 0
      %411 = vperm.xlu0 %410, %v364
      %v412 = vpop.permute.xlu0 %411
      %vm413 = vcmp.eq.s32.totalorder %v367, 1
      %vm414 = vcmp.eq.s32.totalorder %v370, 1
      %vm415 = vcmp.eq.s32.totalorder %v373, 1
      %vm416 = vcmp.eq.s32.totalorder %v376, 1
      %vm417 = vcmp.eq.s32.totalorder %v379, 1
      %vm418 = vcmp.eq.s32.totalorder %v382, 1
      %vm419 = vcmp.eq.s32.totalorder %v385, 1
      %vm420 = vcmp.eq.s32.totalorder %v388, 1
      %vm421 = vcmp.eq.s32.totalorder %v391, 1
      %vm422 = vcmp.eq.s32.totalorder %v394, 1
      %vm423 = vcmp.eq.s32.totalorder %v397, 1
      %vm424 = vcmp.eq.s32.totalorder %v400, 1
      %vm425 = vcmp.eq.s32.totalorder %v403, 1
      %vm426 = vcmp.eq.s32.totalorder %v406, 1
      %vm427 = vcmp.eq.s32.totalorder %v409, 1
      %vm428 = vcmp.eq.s32.totalorder %v412, 1
      %v429 = vsel %vm413, %v234, 0.0
      %v430 = vsel %vm414, %v235, 0.0
      %v431 = vsel %vm415, %v236, 0.0
      %v432 = vsel %vm416, %v237, 0.0
      %v433 = vsel %vm417, %v238, 0.0
      %v434 = vsel %vm418, %v239, 0.0
      %v435 = vsel %vm419, %v240, 0.0
      %v436 = vsel %vm420, %v241, 0.0
      %v437 = vsel %vm421, %v242, 0.0
      %v438 = vsel %vm422, %v243, 0.0
      %v439 = vsel %vm423, %v244, 0.0
      %v440 = vsel %vm424, %v245, 0.0
      %v441 = vsel %vm425, %v246, 0.0
      %v442 = vsel %vm426, %v247, 0.0
      %v443 = vsel %vm427, %v248, 0.0
      %v444 = vsel %vm428, %v249, 0.0
      %v445 = vadd.f32 %v429, %v430
      %v446 = vadd.f32 %v445, %v431
      %v447 = vadd.f32 %v446, %v432
      %v448 = vadd.f32 %v447, %v433
      %v449 = vadd.f32 %v448, %v434
      %v450 = vadd.f32 %v449, %v435
      %v451 = vadd.f32 %v450, %v436
      %v452 = vadd.f32 %v451, %v437
      %v453 = vadd.f32 %v452, %v438
      %v454 = vadd.f32 %v453, %v439
      %v455 = vadd.f32 %v454, %v440
      %v456 = vadd.f32 %v455, %v441
      %v457 = vadd.f32 %v456, %v442
      %v458 = vadd.f32 %v457, %v443
      %v459 = vadd.f32 %v458, %v444
      %v460 = vrot.slane %v459, 4
      %v461 = vadd.f32 %v459, %v460
      %v462 = vrot.slane %v461, 2
      %v463 = vadd.f32 %v461, %v462
      %v464 = vrot.slane %v463, 1
      %v465 = vadd.f32 %v463, %v464
      %v466 = vmul.f32 %v429, %v429
      %v467 = vmul.f32 %v430, %v430
      %v468 = vmul.f32 %v431, %v431
      %v469 = vmul.f32 %v432, %v432
      %v470 = vmul.f32 %v433, %v433
      %v471 = vmul.f32 %v434, %v434
      %v472 = vmul.f32 %v435, %v435
      %v473 = vmul.f32 %v436, %v436
      %v474 = vmul.f32 %v437, %v437
      %v475 = vmul.f32 %v438, %v438
      %v476 = vmul.f32 %v439, %v439
      %v477 = vmul.f32 %v440, %v440
      %v478 = vmul.f32 %v441, %v441
      %v479 = vmul.f32 %v442, %v442
      %v480 = vmul.f32 %v443, %v443
      %v481 = vmul.f32 %v444, %v444
      %v482 = vadd.f32 %v466, %v467
      %v483 = vadd.f32 %v482, %v468
      %v484 = vadd.f32 %v483, %v469
      %v485 = vadd.f32 %v484, %v470
      %v486 = vadd.f32 %v485, %v471
      %v487 = vadd.f32 %v486, %v472
      %v488 = vadd.f32 %v487, %v473
      %v489 = vadd.f32 %v488, %v474
      %v490 = vadd.f32 %v489, %v475
      %v491 = vadd.f32 %v490, %v476
      %v492 = vadd.f32 %v491, %v477
      %v493 = vadd.f32 %v492, %v478
      %v494 = vadd.f32 %v493, %v479
      %v495 = vadd.f32 %v494, %v480
      %v496 = vadd.f32 %v495, %v481
      %v497 = vrot.slane %v496, 4
      %v498 = vadd.f32 %v496, %v497
      %v499 = vrot.slane %v498, 2
      %v500 = vadd.f32 %v498, %v499
      %v501 = vrot.slane %v500, 1
      %v502 = vadd.f32 %v500, %v501
      %v503 = vsel %vm333, 1.0, 0.0
      %v504 = vsel %vm334, 1.0, 0.0
      %v505 = vsel %vm335, 1.0, 0.0
      %v506 = vsel %vm336, 1.0, 0.0
      %v507 = vsel %vm337, 1.0, 0.0
      %v508 = vsel %vm338, 1.0, 0.0
      %v509 = vsel %vm339, 1.0, 0.0
      %v510 = vsel %vm340, 1.0, 0.0
      %v511 = vsel %vm341, 1.0, 0.0
      %v512 = vsel %vm342, 1.0, 0.0
      %v513 = vsel %vm343, 1.0, 0.0
      %v514 = vsel %vm344, 1.0, 0.0
      %v515 = vsel %vm345, 1.0, 0.0
      %v516 = vsel %vm346, 1.0, 0.0
      %v517 = vsel %vm347, 1.0, 0.0
      %v518 = vsel %vm348, 1.0, 0.0
      %vm519 = vcmask 7168
      %v520 = vsel %vm519, %v503, 0.0
      %v521 = vsel %vm519, %v504, 0.0
      %v522 = vadd.f32 %v520, %v521
      %v523 = vsel %vm519, %v505, 0.0
      %v524 = vadd.f32 %v522, %v523
      %v525 = vsel %vm519, %v506, 0.0
      %v526 = vadd.f32 %v524, %v525
      %v527 = vsel %vm519, %v507, 0.0
      %v528 = vadd.f32 %v526, %v527
      %v529 = vsel %vm519, %v508, 0.0
      %v530 = vadd.f32 %v528, %v529
      %v531 = vsel %vm519, %v509, 0.0
      %v532 = vadd.f32 %v530, %v531
      %v533 = vsel %vm519, %v510, 0.0
      %v534 = vadd.f32 %v532, %v533
      %v535 = vsel %vm519, %v511, 0.0
      %v536 = vadd.f32 %v534, %v535
      %v537 = vsel %vm519, %v512, 0.0
      %v538 = vadd.f32 %v536, %v537
      %v539 = vsel %vm519, %v513, 0.0
      %v540 = vadd.f32 %v538, %v539
      %v541 = vsel %vm519, %v514, 0.0
      %v542 = vadd.f32 %v540, %v541
      %v543 = vsel %vm519, %v515, 0.0
      %v544 = vadd.f32 %v542, %v543
      %v545 = vsel %vm519, %v516, 0.0
      %v546 = vadd.f32 %v544, %v545
      %v547 = vsel %vm519, %v517, 0.0
      %v548 = vadd.f32 %v546, %v547
      %v549 = vsel %vm519, %v518, 0.0
      %v550 = vadd.f32 %v548, %v549
      %v551 = vrot.slane %v550, 4
      %v552 = vadd.f32 %v550, %v551
      %v553 = vrot.slane %v552, 2
      %v554 = vadd.f32 %v552, %v553
      %v555 = vrot.slane %v554, 1
      %v556 = vadd.f32 %v554, %v555
      %558 = vset.pattern.permute.xlu0 0
      %559 = vperm.xlu0 %558, %v556
      %v560 = vpop.permute.xlu0 %559
      %vm562 = vcmask 1040384
      %v563 = vsel %vm562, %v465, %v502
      %vm564 = vcmask 1041408
      %v565 = vsel %vm564, %v563, %v560
      %566 = vst [vmem:[%s233] sm:$0x7] %v565
      %p567 = scmp.lt.s32.totalorder %s17, 1
      %s568 = scalar_select %p567, %s17, 1
      %p569 = scmp.lt.s32.totalorder %s18, 0
      %s570 = scalar_select %p569, %s18, 0
      %s571 = sadd.s32 %s570, %s568
      %s572 = smul.addr %s571, 4
      %s573 = scalar_lea.vmem %s2, %s572
      // Predicated region
      $region29: #{_lambda_.3} parent=27 // pred_check
        %p574 = pneg %p101
      $region30: #{_lambda_.3} parent=27 // pred_check_branch
        %576 = sbr.rel (%p574) target = $region32
      $region31: #{_lambda_.3} parent=27 // pred_region
        _
      $region32: #{_lambda_.3} parent=27 // pred_fallthru
        _
    $region28: #{_lambda_.3} parent=5 // pred_fallthru
      _
    %p577 = scmp.le.s32.totalorder 2, %s8
    // Predicated region
    $region33: #{_lambda_.3} parent=5 // pred_check
      %p578 = pneg %p577
    $region34: #{_lambda_.3} parent=5 // pred_check_branch
      %580 = sbr.rel (%p578) target = $region36
    $region35: #{_lambda_.3} parent=5 // pred_region
      %s581 = ssub.s32 %s8, 2
      // Predicated region
      $region37: #{_lambda_.3} parent=35 // pred_check
        %p582 = pneg %p107
      $region38: #{_lambda_.3} parent=35 // pred_check_branch
        %584 = sbr.rel (%p582) target = $region40
      $region39: #{_lambda_.3} parent=35 // pred_region
        %p585 = scmp.lt.s32.totalorder %s19, 1
        %s586 = scalar_select %p585, %s19, 1
        %p587 = scmp.lt.s32.totalorder %s20, 0
        %s588 = scalar_select %p587, %s20, 0
        %s589 = sadd.s32 %s588, %s586
        %s590 = smul.addr %s589, 4
        %s591 = scalar_lea.vmem %s2, %s590
      $region40: #{_lambda_.3} parent=35 // pred_fallthru
        _
    $region36: #{_lambda_.3} parent=5 // pred_fallthru
      _
  $region6: #{_lambda_.3} parent=0 // loop_footer
    %s12 = sadd.s32 1, %s8
  $region7: #{_lambda_.3} parent=0 // loop_footer_branch
    %7 = sbr.rel target = $region3
  $region8: #{_lambda_.3} parent=0 // loop_exit
    _

// kernel: _lambda_.4
$region0: #{_lambda_.4}
  #allocation0 [shape = 'u32[]', space=smem, size = 0x4, offset = 0x4, fixed_abs, tag = 'smem constant byte address 0x4 - core index']
  #allocation1 [shape = 'u32[72,128]{1,0:T(1,128)}', space=vmem, size = 0x9000, scoped, tag = 'internal scratch']
  %s0 = inlined_call_operand.vmem [shape: f32[2,16,128], index: 0, kind: input, shape index: {}]
  %s1 = inlined_call_operand.vmem [shape: f32[2,16,1], index: 1, kind: input, shape index: {}]
  %s2 = inlined_call_operand.vmem [shape: f32[2,1,8,1], index: 2, kind: input, shape index: {}]
  %s3 = inlined_call_operand.vmem [shape: f32[1,128], index: 3, kind: input, shape index: {}]
  %s4 = inlined_call_operand.vmem [shape: f32[1,128], index: 4, kind: input, shape index: {}]
  %s5 = inlined_call_operand.vmem [shape: f32[16,128], index: 5, kind: input, shape index: {}]
  %s6 = inlined_call_operand.vmem [shape: f32[2,4,16], index: 6, kind: output, shape index: {0}]
  %s7 = inlined_call_operand.vmem [shape: f32[2,1,8,1], index: 7, kind: output, shape index: {1}]
  %8 = xla_tuple %s6, %s7
  %s9 = sld [smem:[#allocation0]]
  $region65: #{_lambda_.4} parent=0
    _
  %s11 = ssub.s32 1, %s9
  %s12 = scalar_select 0, %s11, %s9
  loop: start=0, step=1, limit=4
  $region2: #{_lambda_.4} parent=0 // loop_pre_header
    _
  $region3: #{_lambda_.4} parent=0 // loop_header
    %s14 = sphi 0, %s18
    %p15 = scmp.ge.s32.totalorder %s14, 4
    %s21 = sphi 0, %s33
    %s22 = sphi 0, %s29
    %s23 = sphi 0, %s21
    %s24 = sphi 0, %s22
    %s25 = sphi 0, %s23
    %s26 = sphi 0, %s24
    %s38 = sphi 0, %s40
    %s41 = sphi 0, %s38
    %s42 = sphi 0, %s41
    %s58 = sphi 0, %s42
    %s66 = sphi 0, %s68
    %s69 = sphi 0, %s66
    %s70 = sphi 0, %s69
    %s86 = sphi 0, %s70
    %s94 = sphi 0, %s96
    %s97 = sphi 0, %s94
    %s98 = sphi 0, %s97
    %s114 = sphi 0, %s98
    %s118 = sphi 0, %s118
    %s120 = sphi 0, %s118
    %s121 = sphi 0, %s120
    %s135 = sphi 0, %s121
    %s139 = sphi 0, %s139
    %s141 = sphi 0, %s139
    %s142 = sphi 0, %s141
    %s156 = sphi 0, %s142
    %s160 = sphi 0, %s160
    %s162 = sphi 0, %s160
    %s163 = sphi 0, %s162
    %s177 = sphi 0, %s163
    %s185 = sphi 0, %s187
    %s188 = sphi 0, %s185
    %s189 = sphi 0, %s188
    %s205 = sphi 0, %s189
    %s213 = sphi 0, %s215
    %s216 = sphi 0, %s213
    %s217 = sphi 0, %s216
    %s233 = sphi 0, %s217
  $region4: #{_lambda_.4} parent=0 // loop_header_branch
    %17 = sbr.rel (%p15) target = $region8
  $region5: #{_lambda_.4} parent=0 // loop_body
    %s19 = ssub.s32 %s14, 1
    %s20 = ssub.s32 %s14, 2
    %s27 = sadd.s32 1, %s22
    %p28 = scmp.ge.s32.totalorder %s27, 1
    %s29 = scalar_select %p28, 0, %s27
    %s30 = sadd.s32 1, %s21
    %s31 = scalar_select %p28, %s30, %s21
    %p32 = scmp.ge.s32.totalorder %s31, 2
    %s33 = scalar_select %p32, 0, %s31
    %s34 = ssub.s32 %s21, %s33
    %s35 = ssub.s32 %s22, %s29
    %s36 = sor.u32 %s34, %s35
    %p37 = scmp.eq.s32.totalorder %s36, 0
    %s39 = sadd.s32 %s38, 1
    %s40 = scalar_select %p37, %s38, %s39
    %p43 = pneg %p37
    %p44 = scmp.eq.s32.totalorder %s14, 1
    %p45 = por %p43, %p44
    %p46 = scmp.ne.s32.totalorder %s38, %s41
    %p47 = scmp.eq.s32.totalorder %s14, 0
    %p48 = por %p46, %p47
    %p49 = scmp.ne.s32.totalorder %s38, %s41
    %p50 = scmp.eq.s32.totalorder %s19, 1
    %p51 = por %p49, %p50
    %p52 = scmp.ne.s32.totalorder %s41, %s42
    %p53 = scmp.eq.s32.totalorder %s19, 0
    %p54 = por %p52, %p53
    %p55 = scmp.ne.s32.totalorder %s41, %s42
    %p56 = scmp.eq.s32.totalorder %s20, 1
    %p57 = por %p55, %p56
    %p59 = scmp.ne.s32.totalorder %s42, %s58
    %p60 = scmp.eq.s32.totalorder %s20, 0
    %p61 = por %p59, %p60
    %s62 = ssub.s32 %s21, %s33
    %s63 = ssub.s32 %s22, %s29
    %s64 = sor.u32 %s62, %s63
    %p65 = scmp.eq.s32.totalorder %s64, 0
    %s67 = sadd.s32 %s66, 1
    %s68 = scalar_select %p65, %s66, %s67
    %p71 = pneg %p65
    %p72 = scmp.eq.s32.totalorder %s14, 1
    %p73 = por %p71, %p72
    %p74 = scmp.ne.s32.totalorder %s66, %s69
    %p75 = scmp.eq.s32.totalorder %s14, 0
    %p76 = por %p74, %p75
    %p77 = scmp.ne.s32.totalorder %s66, %s69
    %p78 = scmp.eq.s32.totalorder %s19, 1
    %p79 = por %p77, %p78
    %p80 = scmp.ne.s32.totalorder %s69, %s70
    %p81 = scmp.eq.s32.totalorder %s19, 0
    %p82 = por %p80, %p81
    %p83 = scmp.ne.s32.totalorder %s69, %s70
    %p84 = scmp.eq.s32.totalorder %s20, 1
    %p85 = por %p83, %p84
    %p87 = scmp.ne.s32.totalorder %s70, %s86
    %p88 = scmp.eq.s32.totalorder %s20, 0
    %p89 = por %p87, %p88
    %s90 = ssub.s32 %s21, %s33
    %s91 = ssub.s32 %s22, %s29
    %s92 = sor.u32 %s90, %s91
    %p93 = scmp.eq.s32.totalorder %s92, 0
    %s95 = sadd.s32 %s94, 1
    %s96 = scalar_select %p93, %s94, %s95
    %p99 = pneg %p93
    %p100 = scmp.eq.s32.totalorder %s14, 1
    %p101 = por %p99, %p100
    %p102 = scmp.ne.s32.totalorder %s94, %s97
    %p103 = scmp.eq.s32.totalorder %s14, 0
    %p104 = por %p102, %p103
    %p105 = scmp.ne.s32.totalorder %s94, %s97
    %p106 = scmp.eq.s32.totalorder %s19, 1
    %p107 = por %p105, %p106
    %p108 = scmp.ne.s32.totalorder %s97, %s98
    %p109 = scmp.eq.s32.totalorder %s19, 0
    %p110 = por %p108, %p109
    %p111 = scmp.ne.s32.totalorder %s97, %s98
    %p112 = scmp.eq.s32.totalorder %s20, 1
    %p113 = por %p111, %p112
    %p115 = scmp.ne.s32.totalorder %s98, %s114
    %p116 = scmp.eq.s32.totalorder %s20, 0
    %p117 = por %p115, %p116
    %s119 = sadd.s32 %s118, 1
    %p122 = scmp.eq.s32.totalorder %s14, 1
    %p123 = scmp.ne.s32.totalorder %s118, %s120
    %p124 = scmp.eq.s32.totalorder %s14, 0
    %p125 = por %p123, %p124
    %p126 = scmp.ne.s32.totalorder %s118, %s120
    %p127 = scmp.eq.s32.totalorder %s19, 1
    %p128 = por %p126, %p127
    %p129 = scmp.ne.s32.totalorder %s120, %s121
    %p130 = scmp.eq.s32.totalorder %s19, 0
    %p131 = por %p129, %p130
    %p132 = scmp.ne.s32.totalorder %s120, %s121
    %p133 = scmp.eq.s32.totalorder %s20, 1
    %p134 = por %p132, %p133
    %p136 = scmp.ne.s32.totalorder %s121, %s135
    %p137 = scmp.eq.s32.totalorder %s20, 0
    %p138 = por %p136, %p137
    %s140 = sadd.s32 %s139, 1
    %p143 = scmp.eq.s32.totalorder %s14, 1
    %p144 = scmp.ne.s32.totalorder %s139, %s141
    %p145 = scmp.eq.s32.totalorder %s14, 0
    %p146 = por %p144, %p145
    %p147 = scmp.ne.s32.totalorder %s139, %s141
    %p148 = scmp.eq.s32.totalorder %s19, 1
    %p149 = por %p147, %p148
    %p150 = scmp.ne.s32.totalorder %s141, %s142
    %p151 = scmp.eq.s32.totalorder %s19, 0
    %p152 = por %p150, %p151
    %p153 = scmp.ne.s32.totalorder %s141, %s142
    %p154 = scmp.eq.s32.totalorder %s20, 1
    %p155 = por %p153, %p154
    %p157 = scmp.ne.s32.totalorder %s142, %s156
    %p158 = scmp.eq.s32.totalorder %s20, 0
    %p159 = por %p157, %p158
    %s161 = sadd.s32 %s160, 1
    %p164 = scmp.eq.s32.totalorder %s14, 1
    %p165 = scmp.ne.s32.totalorder %s160, %s162
    %p166 = scmp.eq.s32.totalorder %s14, 0
    %p167 = por %p165, %p166
    %p168 = scmp.ne.s32.totalorder %s160, %s162
    %p169 = scmp.eq.s32.totalorder %s19, 1
    %p170 = por %p168, %p169
    %p171 = scmp.ne.s32.totalorder %s162, %s163
    %p172 = scmp.eq.s32.totalorder %s19, 0
    %p173 = por %p171, %p172
    %p174 = scmp.ne.s32.totalorder %s162, %s163
    %p175 = scmp.eq.s32.totalorder %s20, 1
    %p176 = por %p174, %p175
    %p178 = scmp.ne.s32.totalorder %s163, %s177
    %p179 = scmp.eq.s32.totalorder %s20, 0
    %p180 = por %p178, %p179
    %s181 = ssub.s32 %s21, %s33
    %s182 = ssub.s32 %s22, %s29
    %s183 = sor.u32 %s181, %s182
    %p184 = scmp.eq.s32.totalorder %s183, 0
    %s186 = sadd.s32 %s185, 1
    %s187 = scalar_select %p184, %s185, %s186
    %p190 = pneg %p184
    %p191 = scmp.eq.s32.totalorder %s14, 1
    %p192 = por %p190, %p191
    %p193 = scmp.ne.s32.totalorder %s185, %s188
    %p194 = scmp.eq.s32.totalorder %s14, 0
    %p195 = por %p193, %p194
    %p196 = scmp.ne.s32.totalorder %s185, %s188
    %p197 = scmp.eq.s32.totalorder %s19, 1
    %p198 = por %p196, %p197
    %p199 = scmp.ne.s32.totalorder %s188, %s189
    %p200 = scmp.eq.s32.totalorder %s19, 0
    %p201 = por %p199, %p200
    %p202 = scmp.ne.s32.totalorder %s188, %s189
    %p203 = scmp.eq.s32.totalorder %s20, 1
    %p204 = por %p202, %p203
    %p206 = scmp.ne.s32.totalorder %s189, %s205
    %p207 = scmp.eq.s32.totalorder %s20, 0
    %p208 = por %p206, %p207
    %s209 = ssub.s32 %s21, %s33
    %s210 = ssub.s32 %s22, %s29
    %s211 = sor.u32 %s209, %s210
    %p212 = scmp.eq.s32.totalorder %s211, 0
    %s214 = sadd.s32 %s213, 1
    %s215 = scalar_select %p212, %s213, %s214
    %p218 = pneg %p212
    %p219 = scmp.eq.s32.totalorder %s14, 1
    %p220 = por %p218, %p219
    %p221 = scmp.ne.s32.totalorder %s213, %s216
    %p222 = scmp.eq.s32.totalorder %s14, 0
    %p223 = por %p221, %p222
    %p224 = scmp.ne.s32.totalorder %s213, %s216
    %p225 = scmp.eq.s32.totalorder %s19, 1
    %p226 = por %p224, %p225
    %p227 = scmp.ne.s32.totalorder %s216, %s217
    %p228 = scmp.eq.s32.totalorder %s19, 0
    %p229 = por %p227, %p228
    %p230 = scmp.ne.s32.totalorder %s216, %s217
    %p231 = scmp.eq.s32.totalorder %s20, 1
    %p232 = por %p230, %p231
    %p234 = scmp.ne.s32.totalorder %s217, %s233
    %p235 = scmp.eq.s32.totalorder %s20, 0
    %p236 = por %p234, %p235
    %p237 = scmp.le.s32.totalorder 1, %s14
    %p238 = scmp.lt.s32.totalorder %s14, 3
    %p239 = pnand %p237, %p238
    %p240 = pneg %p239
    // Predicated region
    $region9: #{_lambda_.4} parent=5 // pred_check
      _
    $region10: #{_lambda_.4} parent=5 // pred_check_branch
      %242 = sbr.rel (%p239) target = $region12
    $region11: #{_lambda_.4} parent=5 // pred_region
      %s243 = ssub.s32 %s14, 1
      // Predicated region
      $region13: #{_lambda_.4} parent=11 // pred_check
        %p244 = pneg %p131
      $region14: #{_lambda_.4} parent=11 // pred_check_branch
        %246 = sbr.rel (%p244) target = $region16
      $region15: #{_lambda_.4} parent=11 // pred_region
        _
      $region16: #{_lambda_.4} parent=11 // pred_fallthru
        _
      // Predicated region
      $region17: #{_lambda_.4} parent=11 // pred_check
        %p247 = pneg %p152
      $region18: #{_lambda_.4} parent=11 // pred_check_branch
        %249 = sbr.rel (%p247) target = $region20
      $region19: #{_lambda_.4} parent=11 // pred_region
        _
      $region20: #{_lambda_.4} parent=11 // pred_fallthru
        _
      // Predicated region
      $region21: #{_lambda_.4} parent=11 // pred_check
        %p250 = pneg %p173
      $region22: #{_lambda_.4} parent=11 // pred_check_branch
        %252 = sbr.rel (%p250) target = $region24
      $region23: #{_lambda_.4} parent=11 // pred_region
        _
      $region24: #{_lambda_.4} parent=11 // pred_fallthru
        _
    $region12: #{_lambda_.4} parent=5 // pred_fallthru
      _
    %p253 = scmp.lt.s32.totalorder %s14, 2
    // Predicated region
    $region25: #{_lambda_.4} parent=5 // pred_check
      %p254 = pneg %p253
    $region26: #{_lambda_.4} parent=5 // pred_check_branch
      %256 = sbr.rel (%p254) target = $region28
    $region27: #{_lambda_.4} parent=5 // pred_region
      // Predicated region
      $region29: #{_lambda_.4} parent=27 // pred_check
        %p257 = pneg %p48
      $region30: #{_lambda_.4} parent=27 // pred_check_branch
        %259 = sbr.rel (%p257) target = $region32
      $region31: #{_lambda_.4} parent=27 // pred_region
        %s260 = smul.u32 16, %s22
        %s261 = ssub.s32 2, %s260
        %s262 = smul.u32 8, %s261
        %p263 = scmp.lt.s32.totalorder %s21, 1
        %s264 = scalar_select %p263, %s21, 1
        %p265 = scmp.lt.s32.totalorder %s260, 1
        %s266 = scalar_select %p265, %s260, 1
        %s267 = smul.addr %s264, 2
        %s268 = sadd.s32 %s266, %s267
        %s269 = smul.addr %s268, 8
        %s270 = scalar_lea.vmem %s0, %s269
        %s271 = smul.u32 16, %s22
        %s272 = ssub.s32 2, %s271
        %s273 = smul.u32 8, %s272
      $region32: #{_lambda_.4} parent=27 // pred_fallthru
        _
      // Predicated region
      $region33: #{_lambda_.4} parent=27 // pred_check
        %p274 = pneg %p76
      $region34: #{_lambda_.4} parent=27 // pred_check_branch
        %276 = sbr.rel (%p274) target = $region36
      $region35: #{_lambda_.4} parent=27 // pred_region
        %s277 = smul.u32 16, %s22
        %s278 = ssub.s32 2, %s277
        %s279 = smul.u32 8, %s278
        %p280 = scmp.lt.s32.totalorder %s21, 1
        %s281 = scalar_select %p280, %s21, 1
        %p282 = scmp.lt.s32.totalorder %s277, 1
        %s283 = scalar_select %p282, %s277, 1
        %s284 = smul.addr %s281, 2
        %s285 = sadd.s32 %s283, %s284
        %s286 = smul.addr %s285, 8
        %s287 = scalar_lea.vmem %s1, %s286
        %s288 = smul.u32 16, %s22
        %s289 = ssub.s32 2, %s288
        %s290 = smul.u32 8, %s289
      $region36: #{_lambda_.4} parent=27 // pred_fallthru
        _
      // Predicated region
      $region37: #{_lambda_.4} parent=27 // pred_check
        %p291 = pneg %p104
      $region38: #{_lambda_.4} parent=27 // pred_check_branch
        %293 = sbr.rel (%p291) target = $region40
      $region39: #{_lambda_.4} parent=27 // pred_region
        %p294 = scmp.lt.s32.totalorder %s21, 1
        %s295 = scalar_select %p294, %s21, 1
        %p296 = scmp.lt.s32.totalorder %s22, 0
        %s297 = scalar_select %p296, %s22, 0
        %s298 = sadd.s32 %s297, %s295
        %s299 = smul.addr %s298, 8
        %s300 = scalar_lea.vmem %s2, %s299
      $region40: #{_lambda_.4} parent=27 // pred_fallthru
        _
    $region28: #{_lambda_.4} parent=5 // pred_fallthru
      _
    %p301 = scmp.le.s32.totalorder 1, %s14
    %p302 = scmp.lt.s32.totalorder %s14, 3
    %p303 = pnand %p301, %p302
    %p304 = pneg %p303
    // Predicated region
    $region41: #{_lambda_.4} parent=5 // pred_check
      _
    $region42: #{_lambda_.4} parent=5 // pred_check_branch
      %306 = sbr.rel (%p303) target = $region44
    $region43: #{_lambda_.4} parent=5 // pred_region
      %s307 = ssub.s32 %s14, 1
      %s308 = smul.u32 16, %s24
      %s309 = ssub.s32 2, %s308
      %s310 = smul.u32 8, %s309
      %p311 = scmp.lt.s32.totalorder %s23, 1
      %s312 = scalar_select %p311, %s23, 1
      %p313 = scmp.lt.s32.totalorder %s308, 1
      %s314 = scalar_select %p313, %s308, 1
      %s315 = smul.addr %s312, 2
      %s316 = sadd.s32 %s314, %s315
      %s317 = smul.addr %s316, 8
      %s318 = scalar_lea.vmem %s0, %s317
      %p319 = pneg %p54
      %p320 = pneg %p51
      %s321 = smul.u32 16, %s24
      %s322 = ssub.s32 2, %s321
      %s323 = smul.u32 8, %s322
      %p324 = scmp.lt.s32.totalorder %s23, 1
      %s325 = scalar_select %p324, %s23, 1
      %p326 = scmp.lt.s32.totalorder %s321, 1
      %s327 = scalar_select %p326, %s321, 1
      %s328 = smul.addr %s325, 2
      %s329 = sadd.s32 %s327, %s328
      %s330 = smul.addr %s329, 8
      %s331 = scalar_lea.vmem %s1, %s330
      %p332 = pneg %p82
      %p333 = pneg %p79
      %p334 = scmp.lt.s32.totalorder %s23, 1
      %s335 = scalar_select %p334, %s23, 1
      %p336 = scmp.lt.s32.totalorder %s24, 0
      %s337 = scalar_select %p336, %s24, 0
      %s338 = sadd.s32 %s337, %s335
      %s339 = smul.addr %s338, 8
      %s340 = scalar_lea.vmem %s2, %s339
      %p341 = pneg %p110
      %p342 = pneg %p107
      %p343 = pneg %p131
      %p344 = pneg %p128
      %p345 = pneg %p152
      %p346 = pneg %p149
      %p347 = pneg %p173
      %p348 = pneg %p170
      %p349 = pneg %p201
      %p350 = pneg %p198
      %p351 = scmp.lt.s32.totalorder %s23, 1
      %s352 = scalar_select %p351, %s23, 1
      %p353 = scmp.lt.s32.totalorder %s24, 0
      %s354 = scalar_select %p353, %s24, 0
      %s355 = sadd.s32 %s354, %s352
      %s356 = smul.addr %s355, 4
      %s357 = scalar_lea.vmem %s6, %s356
      %p358 = pneg %p229
      %p359 = pneg %p226
      %p360 = scmp.lt.s32.totalorder %s23, 1
      %s361 = scalar_select %p360, %s23, 1
      %p362 = scmp.lt.s32.totalorder %s24, 0
      %s363 = scalar_select %p362, %s24, 0
      %s364 = sadd.s32 %s363, %s361
      %s365 = smul.addr %s364, 8
      %s366 = scalar_lea.vmem %s7, %s365
      %s367 = smul.u32 16, %s24
      %s368 = ssub.s32 2, %s367
      %s369 = smul.u32 8, %s368
      %p370 = scmp.lt.s32.totalorder %s23, 1
      %s371 = scalar_select %p370, %s23, 1
      %p372 = scmp.lt.s32.totalorder %s367, 1
      %s373 = scalar_select %p372, %s367, 1
      %s374 = smul.addr %s371, 2
      %s375 = sadd.s32 %s373, %s374
      %s376 = smul.addr %s375, 8
      %s377 = scalar_lea.vmem %s0, %s376
      %s378 = smul.u32 16, %s24
      %s379 = ssub.s32 2, %s378
      %s380 = smul.u32 8, %s379
      %s381 = smul.u32 16, %s24
      %s382 = ssub.s32 2, %s381
      %s383 = smul.u32 8, %s382
      %p384 = scmp.lt.s32.totalorder %s23, 1
      %s385 = scalar_select %p384, %s23, 1
      %p386 = scmp.lt.s32.totalorder %s381, 1
      %s387 = scalar_select %p386, %s381, 1
      %s388 = smul.addr %s385, 2
      %s389 = sadd.s32 %s387, %s388
      %s390 = smul.addr %s389, 8
      %s391 = scalar_lea.vmem %s1, %s390
      %s392 = smul.u32 16, %s24
      %s393 = ssub.s32 2, %s392
      %s394 = smul.u32 8, %s393
      %p395 = scmp.lt.s32.totalorder %s23, 1
      %s396 = scalar_select %p395, %s23, 1
      %p397 = scmp.lt.s32.totalorder %s24, 0
      %s398 = scalar_select %p397, %s24, 0
      %s399 = sadd.s32 %s398, %s396
      %s400 = smul.addr %s399, 8
      %s401 = scalar_lea.vmem %s2, %s400
      %p402 = scmp.lt.s32.totalorder %s23, 1
      %s403 = scalar_select %p402, %s23, 1
      %p404 = scmp.lt.s32.totalorder %s24, 0
      %s405 = scalar_select %p404, %s24, 0
      %s406 = sadd.s32 %s405, %s403
      %s407 = smul.addr %s406, 4
      %s408 = scalar_lea.vmem %s6, %s407
      %p409 = scmp.lt.s32.totalorder %s23, 1
      %s410 = scalar_select %p409, %s23, 1
      %p411 = scmp.lt.s32.totalorder %s24, 0
      %s412 = scalar_select %p411, %s24, 0
      %s413 = sadd.s32 %s412, %s410
      %s414 = smul.addr %s413, 8
      %s415 = scalar_lea.vmem %s7, %s414
      %v416 = vlaneseq
      %v417 = vshrl.u32 %v416, 7
      %v418 = vadd.s32 %v417, 8
      %v419 = vadd.s32 %v417, 16
      %v420 = vadd.s32 %v417, 24
      %v421 = vadd.s32 %v417, 32
      %v422 = vadd.s32 %v417, 40
      %v423 = vadd.s32 %v417, 48
      %v424 = vadd.s32 %v417, 56
      %v425 = vadd.s32 %v417, 64
      %v426 = vadd.s32 %v417, 72
      %v427 = vadd.s32 %v417, 80
      %v428 = vadd.s32 %v417, 88
      %v429 = vadd.s32 %v417, 96
      %v430 = vadd.s32 %v417, 104
      %v431 = vadd.s32 %v417, 112
      %v432 = vadd.s32 %v417, 120
      %s433 = smul.u32 %s24, 128
      %v434 = vstv %s433
      %v435 = vadd.s32 %v417, %v434
      %v436 = vadd.s32 %v418, %v434
      %v437 = vadd.s32 %v419, %v434
      %v438 = vadd.s32 %v420, %v434
      %v439 = vadd.s32 %v421, %v434
      %v440 = vadd.s32 %v422, %v434
      %v441 = vadd.s32 %v423, %v434
      %v442 = vadd.s32 %v424, %v434
      %v443 = vadd.s32 %v425, %v434
      %v444 = vadd.s32 %v426, %v434
      %v445 = vadd.s32 %v427, %v434
      %v446 = vadd.s32 %v428, %v434
      %v447 = vadd.s32 %v429, %v434
      %v448 = vadd.s32 %v430, %v434
      %v449 = vadd.s32 %v431, %v434
      %v450 = vadd.s32 %v432, %v434
      %v451 = vld [vmem:[%s391] sm:$0xff]
      %v452 = vld [vmem:[%s391 + $0x8] sm:$0xff]
      %v453 = vld [vmem:[%s391 + $0x10] sm:$0xff]
      %v454 = vld [vmem:[%s391 + $0x18] sm:$0xff]
      %v455 = vld [vmem:[%s391 + $0x20] sm:$0xff]
      %v456 = vld [vmem:[%s391 + $0x28] sm:$0xff]
      %v457 = vld [vmem:[%s391 + $0x30] sm:$0xff]
      %v458 = vld [vmem:[%s391 + $0x38] sm:$0xff]
      %v459 = vld [vmem:[%s391 + $0x40] sm:$0xff]
      %v460 = vld [vmem:[%s391 + $0x48] sm:$0xff]
      %v461 = vld [vmem:[%s391 + $0x50] sm:$0xff]
      %v462 = vld [vmem:[%s391 + $0x58] sm:$0xff]
      %v463 = vld [vmem:[%s391 + $0x60] sm:$0xff]
      %v464 = vld [vmem:[%s391 + $0x68] sm:$0xff]
      %v465 = vld [vmem:[%s391 + $0x70] sm:$0xff]
      %v466 = vld [vmem:[%s391 + $0x78] sm:$0xff]
      %vm467 = vcmp.gt.f32.partialorder %v451, 0.0
      %vm468 = vcmp.gt.f32.partialorder %v452, 0.0
      %vm469 = vcmp.gt.f32.partialorder %v453, 0.0
      %vm470 = vcmp.gt.f32.partialorder %v454, 0.0
      %vm471 = vcmp.gt.f32.partialorder %v455, 0.0
      %vm472 = vcmp.gt.f32.partialorder %v456, 0.0
      %vm473 = vcmp.gt.f32.partialorder %v457, 0.0
      %vm474 = vcmp.gt.f32.partialorder %v458, 0.0
      %vm475 = vcmp.gt.f32.partialorder %v459, 0.0
      %vm476 = vcmp.gt.f32.partialorder %v460, 0.0
      %vm477 = vcmp.gt.f32.partialorder %v461, 0.0
      %vm478 = vcmp.gt.f32.partialorder %v462, 0.0
      %vm479 = vcmp.gt.f32.partialorder %v463, 0.0
      %vm480 = vcmp.gt.f32.partialorder %v464, 0.0
      %vm481 = vcmp.gt.f32.partialorder %v465, 0.0
      %vm482 = vcmp.gt.f32.partialorder %v466, 0.0
      %vm483 = vcmp.lt.s32.totalorder %v435, 16
      %vm484 = vcmp.lt.s32.totalorder %v436, 16
      %vm485 = vcmp.lt.s32.totalorder %v437, 16
      %vm486 = vcmp.lt.s32.totalorder %v438, 16
      %vm487 = vcmp.lt.s32.totalorder %v439, 16
      %vm488 = vcmp.lt.s32.totalorder %v440, 16
      %vm489 = vcmp.lt.s32.totalorder %v441, 16
      %vm490 = vcmp.lt.s32.totalorder %v442, 16
      %vm491 = vcmp.lt.s32.totalorder %v443, 16
      %vm492 = vcmp.lt.s32.totalorder %v444, 16
      %vm493 = vcmp.lt.s32.totalorder %v445, 16
      %vm494 = vcmp.lt.s32.totalorder %v446, 16
      %vm495 = vcmp.lt.s32.totalorder %v447, 16
      %vm496 = vcmp.lt.s32.totalorder %v448, 16
      %vm497 = vcmp.lt.s32.totalorder %v449, 16
      %vm498 = vcmp.lt.s32.totalorder %v450, 16
      %vm499 = vmand %vm467, %vm483
      %vm500 = vmand %vm468, %vm484
      %vm501 = vmand %vm469, %vm485
      %vm502 = vmand %vm470, %vm486
      %vm503 = vmand %vm471, %vm487
      %vm504 = vmand %vm472, %vm488
      %vm505 = vmand %vm473, %vm489
      %vm506 = vmand %vm474, %vm490
      %vm507 = vmand %vm475, %vm491
      %vm508 = vmand %vm476, %vm492
      %vm509 = vmand %vm477, %vm493
      %vm510 = vmand %vm478, %vm494
      %vm511 = vmand %vm479, %vm495
      %vm512 = vmand %vm480, %vm496
      %vm513 = vmand %vm481, %vm497
      %vm514 = vmand %vm482, %vm498
      %v515 = vld [vmem:[%s377] sm:$0xff]
      %v516 = vld [vmem:[%s377 + $0x8] sm:$0xff]
      %v517 = vld [vmem:[%s377 + $0x10] sm:$0xff]
      %v518 = vld [vmem:[%s377 + $0x18] sm:$0xff]
      %v519 = vld [vmem:[%s377 + $0x20] sm:$0xff]
      %v520 = vld [vmem:[%s377 + $0x28] sm:$0xff]
      %v521 = vld [vmem:[%s377 + $0x30] sm:$0xff]
      %v522 = vld [vmem:[%s377 + $0x38] sm:$0xff]
      %v523 = vld [vmem:[%s377 + $0x40] sm:$0xff]
      %v524 = vld [vmem:[%s377 + $0x48] sm:$0xff]
      %v525 = vld [vmem:[%s377 + $0x50] sm:$0xff]
      %v526 = vld [vmem:[%s377 + $0x58] sm:$0xff]
      %v527 = vld [vmem:[%s377 + $0x60] sm:$0xff]
      %v528 = vld [vmem:[%s377 + $0x68] sm:$0xff]
      %v529 = vld [vmem:[%s377 + $0x70] sm:$0xff]
      %v530 = vld [vmem:[%s377 + $0x78] sm:$0xff]
      %v531 = vld [vmem:[%s3] sm:$0x1]
      %v533 = vperm.slane %v531, 0
      %v535 = vmul.f32 %v515, %v533
      %v536 = vmul.f32 %v516, %v533
      %v537 = vmul.f32 %v517, %v533
      %v538 = vmul.f32 %v518, %v533
      %v539 = vmul.f32 %v519, %v533
      %v540 = vmul.f32 %v520, %v533
      %v541 = vmul.f32 %v521, %v533
      %v542 = vmul.f32 %v522, %v533
      %v543 = vmul.f32 %v523, %v533
      %v544 = vmul.f32 %v524, %v533
      %v545 = vmul.f32 %v525, %v533
      %v546 = vmul.f32 %v526, %v533
      %v547 = vmul.f32 %v527, %v533
      %v548 = vmul.f32 %v528, %v533
      %v549 = vmul.f32 %v529, %v533
      %v550 = vmul.f32 %v530, %v533
      %v551 = vld [vmem:[%s4] sm:$0x1]
      %v553 = vperm.slane %v551, 0
      %v555 = vadd.f32 %v535, %v553
      %v556 = vadd.f32 %v536, %v553
      %v557 = vadd.f32 %v537, %v553
      %v558 = vadd.f32 %v538, %v553
      %v559 = vadd.f32 %v539, %v553
      %v560 = vadd.f32 %v540, %v553
      %v561 = vadd.f32 %v541, %v553
      %v562 = vadd.f32 %v542, %v553
      %v563 = vadd.f32 %v543, %v553
      %v564 = vadd.f32 %v544, %v553
      %v565 = vadd.f32 %v545, %v553
      %v566 = vadd.f32 %v546, %v553
      %v567 = vadd.f32 %v547, %v553
      %v568 = vadd.f32 %v548, %v553
      %v569 = vadd.f32 %v549, %v553
      %v570 = vadd.f32 %v550, %v553
      %v571 = vsel %vm499, 1, 0
      %v572 = vsel %vm500, 1, 0
      %v573 = vsel %vm501, 1, 0
      %v574 = vsel %vm502, 1, 0
      %v575 = vsel %vm503, 1, 0
      %v576 = vsel %vm504, 1, 0
      %v577 = vsel %vm505, 1, 0
      %v578 = vsel %vm506, 1, 0
      %v579 = vsel %vm507, 1, 0
      %v580 = vsel %vm508, 1, 0
      %v581 = vsel %vm509, 1, 0
      %v582 = vsel %vm510, 1, 0
      %v583 = vsel %vm511, 1, 0
      %v584 = vsel %vm512, 1, 0
      %v585 = vsel %vm513, 1, 0
      %v586 = vsel %vm514, 1, 0
      %587 = vset.pattern.permute.xlu0 0
      %588 = vperm.xlu0 %587, %v571
      %v589 = vpop.permute.xlu0 %588
      %590 = vset.pattern.permute.xlu0 0
      %591 = vperm.xlu0 %590, %v572
      %v592 = vpop.permute.xlu0 %591
      %593 = vset.pattern.permute.xlu0 0
      %594 = vperm.xlu0 %593, %v573
      %v595 = vpop.permute.xlu0 %594
      %596 = vset.pattern.permute.xlu0 0
      %597 = vperm.xlu0 %596, %v574
      %v598 = vpop.permute.xlu0 %597
      %599 = vset.pattern.permute.xlu0 0
      %600 = vperm.xlu0 %599, %v575
      %v601 = vpop.permute.xlu0 %600
      %602 = vset.pattern.permute.xlu0 0
      %603 = vperm.xlu0 %602, %v576
      %v604 = vpop.permute.xlu0 %603
      %605 = vset.pattern.permute.xlu0 0
      %606 = vperm.xlu0 %605, %v577
      %v607 = vpop.permute.xlu0 %606
      %608 = vset.pattern.permute.xlu0 0
      %609 = vperm.xlu0 %608, %v578
      %v610 = vpop.permute.xlu0 %609
      %611 = vset.pattern.permute.xlu0 0
      %612 = vperm.xlu0 %611, %v579
      %v613 = vpop.permute.xlu0 %612
      %614 = vset.pattern.permute.xlu0 0
      %615 = vperm.xlu0 %614, %v580
      %v616 = vpop.permute.xlu0 %615
      %617 = vset.pattern.permute.xlu0 0
      %618 = vperm.xlu0 %617, %v581
      %v619 = vpop.permute.xlu0 %618
      %620 = vset.pattern.permute.xlu0 0
      %621 = vperm.xlu0 %620, %v582
      %v622 = vpop.permute.xlu0 %621
      %623 = vset.pattern.permute.xlu0 0
      %624 = vperm.xlu0 %623, %v583
      %v625 = vpop.permute.xlu0 %624
      %626 = vset.pattern.permute.xlu0 0
      %627 = vperm.xlu0 %626, %v584
      %v628 = vpop.permute.xlu0 %627
      %629 = vset.pattern.permute.xlu0 0
      %630 = vperm.xlu0 %629, %v585
      %v631 = vpop.permute.xlu0 %630
      %632 = vset.pattern.permute.xlu0 0
      %633 = vperm.xlu0 %632, %v586
      %v634 = vpop.permute.xlu0 %633
      %vm635 = vcmp.eq.s32.totalorder %v589, 1
      %vm636 = vcmp.eq.s32.totalorder %v592, 1
      %vm637 = vcmp.eq.s32.totalorder %v595, 1
      %vm638 = vcmp.eq.s32.totalorder %v598, 1
      %vm639 = vcmp.eq.s32.totalorder %v601, 1
      %vm640 = vcmp.eq.s32.totalorder %v604, 1
      %vm641 = vcmp.eq.s32.totalorder %v607, 1
      %vm642 = vcmp.eq.s32.totalorder %v610, 1
      %vm643 = vcmp.eq.s32.totalorder %v613, 1
      %vm644 = vcmp.eq.s32.totalorder %v616, 1
      %vm645 = vcmp.eq.s32.totalorder %v619, 1
      %vm646 = vcmp.eq.s32.totalorder %v622, 1
      %vm647 = vcmp.eq.s32.totalorder %v625, 1
      %vm648 = vcmp.eq.s32.totalorder %v628, 1
      %vm649 = vcmp.eq.s32.totalorder %v631, 1
      %vm650 = vcmp.eq.s32.totalorder %v634, 1
      %v651 = vsel %vm635, %v555, 0.0
      %v652 = vsel %vm636, %v556, 0.0
      %v653 = vsel %vm637, %v557, 0.0
      %v654 = vsel %vm638, %v558, 0.0
      %v655 = vsel %vm639, %v559, 0.0
      %v656 = vsel %vm640, %v560, 0.0
      %v657 = vsel %vm641, %v561, 0.0
      %v658 = vsel %vm642, %v562, 0.0
      %v659 = vsel %vm643, %v563, 0.0
      %v660 = vsel %vm644, %v564, 0.0
      %v661 = vsel %vm645, %v565, 0.0
      %v662 = vsel %vm646, %v566, 0.0
      %v663 = vsel %vm647, %v567, 0.0
      %v664 = vsel %vm648, %v568, 0.0
      %v665 = vsel %vm649, %v569, 0.0
      %v666 = vsel %vm650, %v570, 0.0
      %v667 = vld [vmem:[%s5] sm:$0xff]
      %v668 = vld [vmem:[%s5 + $0x8] sm:$0xff]
      %669 = vmatpush.xpose.msra.mxu0 %v666
      %670 = vmatpush.xpose.msra.mxu0 %v665
      %671 = vmatpush.xpose.msra.mxu0 %v664
      %672 = vmatpush.xpose.msra.mxu0 %v663
      %673 = vmatpush.xpose.msra.mxu0 %v662
      %674 = vmatpush.xpose.msra.mxu0 %v661
      %675 = vmatpush.xpose.msra.mxu0 %v660
      %676 = vmatpush.xpose.msra.mxu0 %v659
      %677 = vmatpush.xpose.msra.mxu0 %v658
      %678 = vmatpush.xpose.msra.mxu0 %v657
      %679 = vmatpush.xpose.msra.mxu0 %v656
      %680 = vmatpush.xpose.msra.mxu0 %v655
      %681 = vmatpush.xpose.msra.mxu0 %v654
      %682 = vmatpush.xpose.msra.mxu0 %v653
      %683 = vmatpush.xpose.msra.mxu0 %v652
      %684 = vmatpush.xpose.msra.mxu0 %v651
      %685 = vmatmul.f32.gmra.mxu0 %v667
      %v686 = vpop.f32.mrf.mxu0
      %v687 = vadd.f32 0.0, %v686
      %688 = vmatmul.f32.gmra.mxu0 %v668
      %v689 = vpop.f32.mrf.mxu0
      %v690 = vadd.f32 0.0, %v689
      %691 = vdwg.mxu0
      %v692 = vld [vmem:[%s401] sm:$0xff]
      %v693 = vlaneseq
      %v694 = vand.u32 %v693, 127
      %vm695 = vcmp.eq.s32.totalorder %v694, 127
      %696 = vrot.lane.b32.xlu0 %v687, 127
      %v697 = vpop.permute.xlu0 %696
      %699 = vset.pattern.permute.xlu0 0
      %700 = vperm.xlu0 %699, %v692
      %v701 = vpop.permute.xlu0 %700
      %v704 = vrot.slane %v697, 4
      %v706 = vsel %vm695, %v701, %v704
      %vm707 = vcmp.eq.s32.totalorder %v694, 0
      %708 = vrot.lane.b32.xlu0 %v690, 1
      %v709 = vpop.permute.xlu0 %708
      %v710 = vsel %vm707, %v701, %v709
      %v711 = vadd.f32 %v706, %v687
      %v713 = vrot.slane %v710, 4
      %v715 = vadd.f32 %v711, %v713
      %716 = vst [vmem:[%s408 - $0x4] sm:$0xf0] %v715
      %v717 = vadd.s32 %v694, %v434
      %vm718 = vcmp.lt.s32.totalorder %v717, 16
      %v719 = vsel %vm718, %v715, 0.0
      %vm720 = vcmask 1047556
      %v721 = vsel %vm720, %v719, 0.0
      %722 = vadd.xlane.f32.xlu0 %v721
      %v723 = vpop.xlane.xlu0 %722
      %v724 = vmul.f32 %v719, %v719
      %v725 = vsel %vm720, %v724, 0.0
      %726 = vadd.xlane.f32.xlu0 %v725
      %v727 = vpop.xlane.xlu0 %726
      %v729 = vrot.slane %v723, 4
      %vm731 = vcmask 1043456
      %v732 = vsel %vm731, %v729, %v727
      %vm733 = vcmask 7168
      %734 = vst.msk [vmem:[%s415] sm:$0xff] %vm733, %v732
      %p735 = scmp.lt.s32.totalorder %s23, 1
      %s736 = scalar_select %p735, %s23, 1
      %p737 = scmp.lt.s32.totalorder %s24, 0
      %s738 = scalar_select %p737, %s24, 0
      %s739 = sadd.s32 %s738, %s736
      %s740 = smul.addr %s739, 4
      %s741 = scalar_lea.vmem %s6, %s740
      %p742 = scmp.lt.s32.totalorder %s23, 1
      %s743 = scalar_select %p742, %s23, 1
      %p744 = scmp.lt.s32.totalorder %s24, 0
      %s745 = scalar_select %p744, %s24, 0
      %s746 = sadd.s32 %s745, %s743
      %s747 = smul.addr %s746, 8
      %s748 = scalar_lea.vmem %s7, %s747
      // Predicated region
      $region45: #{_lambda_.4} parent=43 // pred_check
        %p749 = pneg %p198
      $region46: #{_lambda_.4} parent=43 // pred_check_branch
        %751 = sbr.rel (%p749) target = $region48
      $region47: #{_lambda_.4} parent=43 // pred_region
        _
      $region48: #{_lambda_.4} parent=43 // pred_fallthru
        _
      // Predicated region
      $region49: #{_lambda_.4} parent=43 // pred_check
        %p752 = pneg %p226
      $region50: #{_lambda_.4} parent=43 // pred_check_branch
        %754 = sbr.rel (%p752) target = $region52
      $region51: #{_lambda_.4} parent=43 // pred_region
        _
      $region52: #{_lambda_.4} parent=43 // pred_fallthru
        _
    $region44: #{_lambda_.4} parent=5 // pred_fallthru
      _
    %p755 = scmp.le.s32.totalorder 2, %s14
    // Predicated region
    $region53: #{_lambda_.4} parent=5 // pred_check
      %p756 = pneg %p755
    $region54: #{_lambda_.4} parent=5 // pred_check_branch
      %758 = sbr.rel (%p756) target = $region56
    $region55: #{_lambda_.4} parent=5 // pred_region
      %s759 = ssub.s32 %s14, 2
      // Predicated region
      $region57: #{_lambda_.4} parent=55 // pred_check
        %p760 = pneg %p204
      $region58: #{_lambda_.4} parent=55 // pred_check_branch
        %762 = sbr.rel (%p760) target = $region60
      $region59: #{_lambda_.4} parent=55 // pred_region
        %p763 = scmp.lt.s32.totalorder %s25, 1
        %s764 = scalar_select %p763, %s25, 1
        %p765 = scmp.lt.s32.totalorder %s26, 0
        %s766 = scalar_select %p765, %s26, 0
        %s767 = sadd.s32 %s766, %s764
        %s768 = smul.addr %s767, 4
        %s769 = scalar_lea.vmem %s6, %s768
      $region60: #{_lambda_.4} parent=55 // pred_fallthru
        _
      // Predicated region
      $region61: #{_lambda_.4} parent=55 // pred_check
        %p770 = pneg %p232
      $region62: #{_lambda_.4} parent=55 // pred_check_branch
        %772 = sbr.rel (%p770) target = $region64
      $region63: #{_lambda_.4} parent=55 // pred_region
        %p773 = scmp.lt.s32.totalorder %s25, 1
        %s774 = scalar_select %p773, %s25, 1
        %p775 = scmp.lt.s32.totalorder %s26, 0
        %s776 = scalar_select %p775, %s26, 0
        %s777 = sadd.s32 %s776, %s774
        %s778 = smul.addr %s777, 8
        %s779 = scalar_lea.vmem %s7, %s778
      $region64: #{_lambda_.4} parent=55 // pred_fallthru
        _
    $region56: #{_lambda_.4} parent=5 // pred_fallthru
      _
  $region6: #{_lambda_.4} parent=0 // loop_footer
    %s18 = sadd.s32 1, %s14
  $region7: #{_lambda_.4} parent=0 // loop_footer_branch
    %13 = sbr.rel target = $region3
  $region8: #{_lambda_.4} parent=0 // loop_exit
    _

// kernel: _lambda_.5
$region0: #{_lambda_.5}
  #allocation0 [shape = 'u32[]', space=smem, size = 0x4, offset = 0x4, fixed_abs, tag = 'smem constant byte address 0x4 - core index']
  #allocation1 [shape = 'u32[72,128]{1,0:T(1,128)}', space=vmem, size = 0x9000, scoped, tag = 'internal scratch']
  %s0 = inlined_call_operand.vmem [shape: f32[2,4,16], index: 0, kind: input, shape index: {}]
  %s1 = inlined_call_operand.vmem [shape: f32[4,1], index: 1, kind: input, shape index: {}]
  %s2 = inlined_call_operand.vmem [shape: f32[4,1], index: 2, kind: input, shape index: {}]
  %s3 = inlined_call_operand.vmem [shape: f32[4,4], index: 3, kind: input, shape index: {}]
  %s4 = inlined_call_operand.hbm [shape: f32[2,4,16], index: 4, kind: output, shape index: {}]
  %s5 = sld [smem:[#allocation0]]
  $region53: #{_lambda_.5} parent=0
    _
  %s7 = ssub.s32 1, %s5
  %s8 = scalar_select 0, %s7, %s5
  $region1: #{_lambda_.5} parent=0
    #allocation2 [shape = 'u8[2048]{0}', space=smem, size = 0x800, scoped, tag = 'input window, operand 3, single buffered']
    #allocation3 [shape = 's32[2]{0}', space=sflag, size = 0x8, scoped, tag = 'scoped memory for _lambda_.5']
    #allocation4 [shape = 's32[2]{0}', space=sflag, size = 0x8, scoped, tag = 'scoped memory for _lambda_.5']
    #allocation5 [shape = 'u8[4096]{0}', space=vmem, size = 0x1000, scoped, tag = 'output window, operand 0']
    %9 = vsyncpa [#allocation4], 0
    %10 = vsyncpa [#allocation3], 0
    %s11 = scalar_lea.sflag [#allocation3], 1
    %12 = vsyncpa %s11, 0
    loop: start=0, step=1, limit=4
    $region2: #{_lambda_.5} parent=1 // loop_pre_header
      _
    $region3: #{_lambda_.5} parent=1 // loop_header
      %s14 = sphi 0, %s18
      %p15 = scmp.ge.s32.totalorder %s14, 4
      %s24 = sphi 0, %s26
      %s27 = sphi 0, %s24
      %s28 = sphi 0, %s27
      %s44 = sphi 0, %s28
      %s48 = sphi 0, %s48
      %s50 = sphi 0, %s48
      %s51 = sphi 0, %s50
      %s65 = sphi 0, %s51
      %s69 = sphi 0, %s69
      %s71 = sphi 0, %s69
      %s72 = sphi 0, %s71
      %s86 = sphi 0, %s72
      %s90 = sphi 0, %s90
      %s92 = sphi 0, %s90
      %s93 = sphi 0, %s92
      %s107 = sphi 0, %s93
      %s113 = sphi 0, %s115
      %s116 = sphi 0, %s113
      %s117 = sphi 0, %s116
      %s133 = sphi 0, %s117
    $region4: #{_lambda_.5} parent=1 // loop_header_branch
      %17 = sbr.rel (%p15) target = $region8
    $region5: #{_lambda_.5} parent=1 // loop_body
      %s19 = ssub.s32 %s14, 1
      %s20 = ssub.s32 %s14, 2
      %s21 = sadd.s32 %s14, 1
      %s22 = ssub.s32 %s14, %s21
      %p23 = scmp.eq.s32.totalorder %s22, 0
      %s25 = sadd.s32 %s24, 1
      %s26 = scalar_select %p23, %s24, %s25
      %p29 = pneg %p23
      %p30 = scmp.eq.s32.totalorder %s14, 1
      %p31 = por %p29, %p30
      %p32 = scmp.ne.s32.totalorder %s24, %s27
      %p33 = scmp.eq.s32.totalorder %s14, 0
      %p34 = por %p32, %p33
      %p35 = scmp.ne.s32.totalorder %s24, %s27
      %p36 = scmp.eq.s32.totalorder %s19, 1
      %p37 = por %p35, %p36
      %p38 = scmp.ne.s32.totalorder %s27, %s28
      %p39 = scmp.eq.s32.totalorder %s19, 0
      %p40 = por %p38, %p39
      %p41 = scmp.ne.s32.totalorder %s27, %s28
      %p42 = scmp.eq.s32.totalorder %s20, 1
      %p43 = por %p41, %p42
      %p45 = scmp.ne.s32.totalorder %s28, %s44
      %p46 = scmp.eq.s32.totalorder %s20, 0
      %p47 = por %p45, %p46
      %s49 = sadd.s32 %s48, 1
      %p52 = scmp.eq.s32.totalorder %s14, 1
      %p53 = scmp.ne.s32.totalorder %s48, %s50
      %p54 = scmp.eq.s32.totalorder %s14, 0
      %p55 = por %p53, %p54
      %p56 = scmp.ne.s32.totalorder %s48, %s50
      %p57 = scmp.eq.s32.totalorder %s19, 1
      %p58 = por %p56, %p57
      %p59 = scmp.ne.s32.totalorder %s50, %s51
      %p60 = scmp.eq.s32.totalorder %s19, 0
      %p61 = por %p59, %p60
      %p62 = scmp.ne.s32.totalorder %s50, %s51
      %p63 = scmp.eq.s32.totalorder %s20, 1
      %p64 = por %p62, %p63
      %p66 = scmp.ne.s32.totalorder %s51, %s65
      %p67 = scmp.eq.s32.totalorder %s20, 0
      %p68 = por %p66, %p67
      %s70 = sadd.s32 %s69, 1
      %p73 = scmp.eq.s32.totalorder %s14, 1
      %p74 = scmp.ne.s32.totalorder %s69, %s71
      %p75 = scmp.eq.s32.totalorder %s14, 0
      %p76 = por %p74, %p75
      %p77 = scmp.ne.s32.totalorder %s69, %s71
      %p78 = scmp.eq.s32.totalorder %s19, 1
      %p79 = por %p77, %p78
      %p80 = scmp.ne.s32.totalorder %s71, %s72
      %p81 = scmp.eq.s32.totalorder %s19, 0
      %p82 = por %p80, %p81
      %p83 = scmp.ne.s32.totalorder %s71, %s72
      %p84 = scmp.eq.s32.totalorder %s20, 1
      %p85 = por %p83, %p84
      %p87 = scmp.ne.s32.totalorder %s72, %s86
      %p88 = scmp.eq.s32.totalorder %s20, 0
      %p89 = por %p87, %p88
      %s91 = sadd.s32 %s90, 1
      %p94 = scmp.eq.s32.totalorder %s14, 1
      %p95 = scmp.ne.s32.totalorder %s90, %s92
      %p96 = scmp.eq.s32.totalorder %s14, 0
      %p97 = por %p95, %p96
      %p98 = scmp.ne.s32.totalorder %s90, %s92
      %p99 = scmp.eq.s32.totalorder %s19, 1
      %p100 = por %p98, %p99
      %p101 = scmp.ne.s32.totalorder %s92, %s93
      %p102 = scmp.eq.s32.totalorder %s19, 0
      %p103 = por %p101, %p102
      %p104 = scmp.ne.s32.totalorder %s92, %s93
      %p105 = scmp.eq.s32.totalorder %s20, 1
      %p106 = por %p104, %p105
      %p108 = scmp.ne.s32.totalorder %s93, %s107
      %p109 = scmp.eq.s32.totalorder %s20, 0
      %p110 = por %p108, %p109
      %s111 = ssub.s32 %s14, %s21
      %p112 = scmp.eq.s32.totalorder %s111, 0
      %s114 = sadd.s32 %s113, 1
      %s115 = scalar_select %p112, %s113, %s114
      %p118 = pneg %p112
      %p119 = scmp.eq.s32.totalorder %s14, 1
      %p120 = por %p118, %p119
      %p121 = scmp.ne.s32.totalorder %s113, %s116
      %p122 = scmp.eq.s32.totalorder %s14, 0
      %p123 = por %p121, %p122
      %p124 = scmp.ne.s32.totalorder %s113, %s116
      %p125 = scmp.eq.s32.totalorder %s19, 1
      %p126 = por %p124, %p125
      %p127 = scmp.ne.s32.totalorder %s116, %s117
      %p128 = scmp.eq.s32.totalorder %s19, 0
      %p129 = por %p127, %p128
      %p130 = scmp.ne.s32.totalorder %s116, %s117
      %p131 = scmp.eq.s32.totalorder %s20, 1
      %p132 = por %p130, %p131
      %p134 = scmp.ne.s32.totalorder %s117, %s133
      %p135 = scmp.eq.s32.totalorder %s20, 0
      %p136 = por %p134, %p135
      %p137 = scmp.le.s32.totalorder 1, %s14
      %p138 = scmp.lt.s32.totalorder %s14, 3
      %p139 = pnand %p137, %p138
      %p140 = pneg %p139
      // Predicated region
      $region9: #{_lambda_.5} parent=5 // pred_check
        _
      $region10: #{_lambda_.5} parent=5 // pred_check_branch
        %142 = sbr.rel (%p139) target = $region12
      $region11: #{_lambda_.5} parent=5 // pred_region
        %s143 = ssub.s32 %s14, 1
        // Predicated region
        $region13: #{_lambda_.5} parent=11 // pred_check
          %p144 = pneg %p61
        $region14: #{_lambda_.5} parent=11 // pred_check_branch
          %146 = sbr.rel (%p144) target = $region16
        $region15: #{_lambda_.5} parent=11 // pred_region
          _
        $region16: #{_lambda_.5} parent=11 // pred_fallthru
          _
        // Predicated region
        $region17: #{_lambda_.5} parent=11 // pred_check
          %p147 = pneg %p82
        $region18: #{_lambda_.5} parent=11 // pred_check_branch
          %149 = sbr.rel (%p147) target = $region20
        $region19: #{_lambda_.5} parent=11 // pred_region
          _
        $region20: #{_lambda_.5} parent=11 // pred_fallthru
          _
        // Predicated region
        $region21: #{_lambda_.5} parent=11 // pred_check
          %p150 = pneg %p103
        $region22: #{_lambda_.5} parent=11 // pred_check_branch
          %152 = sbr.rel (%p150) target = $region24
        $region23: #{_lambda_.5} parent=11 // pred_region
          %154 = vsyncadd [#allocation4], 0
          %s156 = sshll.u32 %s3, 4
          %s157 = int_to_ptr.vmem [resolvable:$true] %s156
          %159 = dma.vmem_to_smem %s157, 64, [#allocation2], [#allocation4]
        $region24: #{_lambda_.5} parent=11 // pred_fallthru
          _
      $region12: #{_lambda_.5} parent=5 // pred_fallthru
        _
      %p160 = scmp.lt.s32.totalorder %s14, 2
      // Predicated region
      $region25: #{_lambda_.5} parent=5 // pred_check
        %p161 = pneg %p160
      $region26: #{_lambda_.5} parent=5 // pred_check_branch
        %163 = sbr.rel (%p161) target = $region28
      $region27: #{_lambda_.5} parent=5 // pred_region
        // Predicated region
        $region29: #{_lambda_.5} parent=27 // pred_check
          %p164 = pneg %p34
        $region30: #{_lambda_.5} parent=27 // pred_check_branch
          %166 = sbr.rel (%p164) target = $region32
        $region31: #{_lambda_.5} parent=27 // pred_region
          %p167 = scmp.lt.s32.totalorder %s14, 1
          %s168 = scalar_select %p167, %s14, 1
          %s169 = smul.addr %s168, 4
          %s170 = scalar_lea.vmem %s0, %s169
        $region32: #{_lambda_.5} parent=27 // pred_fallthru
          _
      $region28: #{_lambda_.5} parent=5 // pred_fallthru
        _
      %p171 = scmp.le.s32.totalorder 1, %s14
      %p172 = scmp.lt.s32.totalorder %s14, 3
      %p173 = pnand %p171, %p172
      %p174 = pneg %p173
      // Predicated region
      $region33: #{_lambda_.5} parent=5 // pred_check
        _
      $region34: #{_lambda_.5} parent=5 // pred_check_branch
        %176 = sbr.rel (%p173) target = $region36
      $region35: #{_lambda_.5} parent=5 // pred_region
        %s177 = ssub.s32 %s14, 1
        // Predicated region
        $region37: #{_lambda_.5} parent=35 // pred_check
          %p178 = pneg %p103
        $region38: #{_lambda_.5} parent=35 // pred_check_branch
          %180 = sbr.rel (%p178) target = $region40
        $region39: #{_lambda_.5} parent=35 // pred_region
          %182 = dma.done [#allocation4], 64
        $region40: #{_lambda_.5} parent=35 // pred_fallthru
          _
        %183 = sfence
        %p184 = scmp.lt.s32.totalorder %s19, 1
        %s185 = scalar_select %p184, %s19, 1
        %s186 = smul.addr %s185, 4
        %s187 = scalar_lea.vmem %s0, %s186
        %p188 = pneg %p40
        %p189 = pneg %p37
        %p190 = pneg %p61
        %p191 = pneg %p58
        %p192 = pneg %p82
        %p193 = pneg %p79
        %p194 = pneg %p103
        %p195 = pneg %p100
        %p196 = pneg %p129
        %p197 = pneg %p126
        %s198 = sand.u32 %s116, 1
        %s199 = scalar_lea.sflag [#allocation3], %s198
        %s200 = sand.u32 %s116, 1
        %s201 = smul.addr %s200, 4
        %s202 = scalar_lea.vmem [#allocation5], %s201
        %p203 = scmp.lt.s32.totalorder %s19, 1
        %s204 = scalar_select %p203, %s19, 1
        %s205 = smul.addr %s204, 4
        %s206 = scalar_lea.vmem %s0, %s205
        %v207 = vld [vmem:[%s206] sm:$0xf]
        %v208 = vld [vmem:[%s1] sm:$0xf]
        %210 = vset.pattern.permute.xlu0 0
        %211 = vperm.xlu0 %210, %v208
        %v212 = vpop.permute.xlu0 %211
        %v214 = vmul.f32 %v207, %v212
        %v215 = vld [vmem:[%s2] sm:$0xf]
        %217 = vset.pattern.permute.xlu0 0
        %218 = vperm.xlu0 %217, %v215
        %v219 = vpop.permute.xlu0 %218
        %v221 = vadd.f32 %v214, %v219
        %v222 = vxor.u32 %v221, 2147483648
        %v223 = vmul.f32 %v222, 1.442695
        %v224 = vpow.pop %v223
        %v225 = vadd.f32 %v224, 1.0
        %v226 = vrcp.pop %v225
        %v227 = vmul.f32 %v225, %v226
        %v228 = vsub.f32 1.0, %v227
        %v229 = vmul.f32 %v226, %v228
        %v230 = vadd.f32 %v226, %v229
        %vm231 = vweird.f32 %v225
        %vm232 = vweird.f32 %v226
        %vm233 = vmor %vm231, %vm232
        %v234 = vsel %vm233, %v226, %v230
        %v235 = vand.u32 2147483647, %v225
        %vm236 = vcmp.eq.f32.partialorder %v235, 8.507059e+37
        %v237 = vand.u32 %v225, 2147483648
        %v238 = vor.u32 1.1754944e-38, %v237
        %v239 = vsel %vm236, %v238, %v234
        %v240 = vmul.f32 1.0, %v239
        %v241 = vmul.f32 %v221, %v240
        %s242 = sld [smem:[#allocation2]]
        %v243 = vstv %s242
        %v244 = vmul.f32 %v243, %v241
        %s245 = sld [smem:[#allocation2 + $0x80]]
        %v246 = vstv %s245
        %v247 = vmul.f32 %v246, %v241
        %v249 = vrot.slane %v247, 1
        %v251 = vadd.f32 %v244, %v249
        %s252 = sld [smem:[#allocation2 + $0x100]]
        %v253 = vstv %s252
        %v254 = vmul.f32 %v253, %v241
        %v256 = vrot.slane %v254, 2
        %v258 = vadd.f32 %v251, %v256
        %s259 = sld [smem:[#allocation2 + $0x180]]
        %v260 = vstv %s259
        %v261 = vmul.f32 %v260, %v241
        %v263 = vrot.slane %v261, 3
        %v265 = vadd.f32 %v258, %v263
        %vm266 = vcmask 122880
        %267 = vst.msk [vmem:[%s202] sm:$0x1] %vm266, %v265
        %s268 = sld [smem:[#allocation2 + $0x1]]
        %v269 = vstv %s268
        %v270 = vmul.f32 %v269, %v241
        %s271 = sld [smem:[#allocation2 + $0x81]]
        %v272 = vstv %s271
        %v273 = vmul.f32 %v272, %v241
        %v275 = vrot.slane %v273, 1
        %v277 = vadd.f32 %v270, %v275
        %s278 = sld [smem:[#allocation2 + $0x101]]
        %v279 = vstv %s278
        %v280 = vmul.f32 %v279, %v241
        %v282 = vrot.slane %v280, 2
        %v284 = vadd.f32 %v277, %v282
        %s285 = sld [smem:[#allocation2 + $0x181]]
        %v286 = vstv %s285
        %v287 = vmul.f32 %v286, %v241
        %v289 = vrot.slane %v287, 3
        %v291 = vadd.f32 %v284, %v289
        %292 = vst.msk [vmem:[%s202 + $0x1] sm:$0x1] %vm266, %v291
        %s293 = sld [smem:[#allocation2 + $0x2]]
        %v294 = vstv %s293
        %v295 = vmul.f32 %v294, %v241
        %s296 = sld [smem:[#allocation2 + $0x82]]
        %v297 = vstv %s296
        %v298 = vmul.f32 %v297, %v241
        %v300 = vrot.slane %v298, 1
        %v302 = vadd.f32 %v295, %v300
        %s303 = sld [smem:[#allocation2 + $0x102]]
        %v304 = vstv %s303
        %v305 = vmul.f32 %v304, %v241
        %v307 = vrot.slane %v305, 2
        %v309 = vadd.f32 %v302, %v307
        %s310 = sld [smem:[#allocation2 + $0x182]]
        %v311 = vstv %s310
        %v312 = vmul.f32 %v311, %v241
        %v314 = vrot.slane %v312, 3
        %v316 = vadd.f32 %v309, %v314
        %317 = vst.msk [vmem:[%s202 + $0x2] sm:$0x1] %vm266, %v316
        %s318 = sld [smem:[#allocation2 + $0x3]]
        %v319 = vstv %s318
        %v320 = vmul.f32 %v319, %v241
        %s321 = sld [smem:[#allocation2 + $0x83]]
        %v322 = vstv %s321
        %v323 = vmul.f32 %v322, %v241
        %v325 = vrot.slane %v323, 1
        %v327 = vadd.f32 %v320, %v325
        %s328 = sld [smem:[#allocation2 + $0x103]]
        %v329 = vstv %s328
        %v330 = vmul.f32 %v329, %v241
        %v332 = vrot.slane %v330, 2
        %v334 = vadd.f32 %v327, %v332
        %s335 = sld [smem:[#allocation2 + $0x183]]
        %v336 = vstv %s335
        %v337 = vmul.f32 %v336, %v241
        %v339 = vrot.slane %v337, 3
        %v341 = vadd.f32 %v334, %v339
        %342 = vst.msk [vmem:[%s202 + $0x3] sm:$0x1] %vm266, %v341
        %s343 = sand.u32 %s116, 1
        %s344 = scalar_lea.sflag [#allocation3], %s343
        %s345 = sand.u32 %s116, 1
        %s346 = smul.addr %s345, 4
        %s347 = scalar_lea.vmem [#allocation5], %s346
        // Predicated region
        $region41: #{_lambda_.5} parent=35 // pred_check
          %p348 = pneg %p126
        $region42: #{_lambda_.5} parent=35 // pred_check_branch
          %350 = sbr.rel (%p348) target = $region44
        $region43: #{_lambda_.5} parent=35 // pred_region
          %352 = vsyncadd %s344, 0
          %s353 = smul.addr %s19, 4
          %s354 = scalar_lea.hbm %s4, %s353
          %s356 = sshll.u32 %s347, 4
          %s357 = int_to_ptr.vmem [resolvable:$true] %s356
          %s358 = sshll.u32 %s354, 4
          %s359 = int_to_ptr.hbm [resolvable:$true] %s358
          %361 = dma.vmem_to_hbm [thread:$0]  %s357, 64, %s359, %s344
        $region44: #{_lambda_.5} parent=35 // pred_fallthru
          _
      $region36: #{_lambda_.5} parent=5 // pred_fallthru
        _
      %p362 = scmp.le.s32.totalorder 2, %s14
      // Predicated region
      $region45: #{_lambda_.5} parent=5 // pred_check
        %p363 = pneg %p362
      $region46: #{_lambda_.5} parent=5 // pred_check_branch
        %365 = sbr.rel (%p363) target = $region48
      $region47: #{_lambda_.5} parent=5 // pred_region
        %s366 = ssub.s32 %s14, 2
        // Predicated region
        $region49: #{_lambda_.5} parent=47 // pred_check
          %p367 = pneg %p132
        $region50: #{_lambda_.5} parent=47 // pred_check_branch
          %369 = sbr.rel (%p367) target = $region52
        $region51: #{_lambda_.5} parent=47 // pred_region
          %s370 = sand.u32 %s117, 1
          %s371 = scalar_lea.sflag [#allocation3], %s370
          %s372 = sand.u32 %s117, 1
          %s373 = smul.addr %s372, 4
          %s374 = scalar_lea.vmem [#allocation5], %s373
          %376 = dma.done %s371, 64
        $region52: #{_lambda_.5} parent=47 // pred_fallthru
          _
      $region48: #{_lambda_.5} parent=5 // pred_fallthru
        _
    $region6: #{_lambda_.5} parent=1 // loop_footer
      %s18 = sadd.s32 1, %s14
    $region7: #{_lambda_.5} parent=1 // loop_footer_branch
      %13 = sbr.rel target = $region3
    $region8: #{_lambda_.5} parent=1 // loop_exit
      _
    %377 = vsyncpa [#allocation3], 1
    %s378 = scalar_lea.sflag [#allocation3], 1
    %379 = vsyncpa %s378, 1
    %380 = vsyncpa [#allocation4], 1
    %s381 = scalar_lea.sflag [#allocation4], 1
    %382 = vsyncpa %s381, 1

</llo_original>
